<compile_context>
chip_gen: v6e
topology: v6e:2x2x1
jax: 0.10.0
libtpu: 0.0.40
codegen_flags: <defaults>
</compile_context>

<pallas_src>
import functools

import jax
import jax.numpy as jnp
from jax.experimental import pallas as pl
from jax.experimental.pallas import tpu as pltpu


def _resconv_kernel(x_ref, top_ref, bot_ref, w_ref, b_ref, o_ref, band_ref,
                    *, TH, W, C, d, n_tiles):
    # x_ref   : (1, TH, W, C)       main row tile (also the residual)
    # top_ref : (1, d,  W, C)       d rows just above the tile (clamped view)
    # bot_ref : (1, d,  W, C)       d rows just below the tile (clamped view)
    # w_ref   : (9*C, C)            im2col conv weight, beta pre-folded
    # b_ref   : (1, C)              conv bias, beta pre-folded
    # o_ref   : (1, TH, W, C)       output tile
    # band_ref: (TH+2d, W+2d, C)    zero-padded band scratch (VMEM, MXU dtype)
    i = pl.program_id(1)
    bdt = band_ref.dtype

    # ---- assemble the zero-padded band in VMEM -----------------------------
    # Only the pad columns / boundary halo strips get zeros; the interior is
    # fully overwritten every step, so no full-band memset.
    band_ref[:, 0:d, :] = jnp.zeros((TH + 2 * d, d, C), bdt)              # left pad
    band_ref[:, d + W:d + W + d, :] = jnp.zeros((TH + 2 * d, d, C), bdt)  # right pad
    band_ref[d:d + TH, d:d + W, :] = x_ref[0].astype(bdt)                 # interior

    @pl.when(i > 0)
    def _fill_top_halo():
        band_ref[0:d, d:d + W, :] = top_ref[0].astype(bdt)

    @pl.when(i == 0)
    def _zero_top_halo():
        band_ref[0:d, d:d + W, :] = jnp.zeros((d, W, C), bdt)

    @pl.when(i < n_tiles - 1)
    def _fill_bottom_halo():
        band_ref[d + TH:d + TH + d, d:d + W, :] = bot_ref[0].astype(bdt)

    @pl.when(i == n_tiles - 1)
    def _zero_bottom_halo():
        band_ref[d + TH:d + TH + d, d:d + W, :] = jnp.zeros((d, W, C), bdt)

    # ---- im2col: one (TH*W, 9C) x (9C, C) MXU matmul, vreg accumulation ----
    taps = [band_ref[kh * d:kh * d + TH, kw * d:kw * d + W, :]
            for kh in range(3) for kw in range(3)]
    patch = jnp.concatenate(taps, axis=-1).reshape(TH * W, 9 * C)
    acc = jnp.dot(patch, w_ref[...], preferred_element_type=jnp.float32)

    # ---- bias (beta folded) + residual + LeakyReLU(0.2) ---------------------
    y = (acc + b_ref[...].astype(jnp.float32)).reshape(TH, W, C)
    y = y + x_ref[0].astype(jnp.float32)
    y = jnp.where(y >= 0, y, 0.2 * y)
    o_ref[0] = y.astype(o_ref.dtype)


def _vmem_capacity_bytes():
    try:
        info = pltpu.get_tpu_info()
        cap = getattr(info, "vmem_capacity_bytes", None)
        if cap:
            return int(cap)
    except Exception:
        pass
    return 64 * 1024 * 1024  # conservative default (v7x per-TensorCore)


def _choose_row_tile(N, H, W, C, d, x_itemsize, band_itemsize, budget_bytes):
    """Largest TH that divides H, is a multiple of d and whose explicit
    per-step VMEM footprint fits the per-generation budget."""
    def footprint(th):
        tile = th * W * C
        halo = d * W * C
        band = (th + 2 * d) * (W + 2 * d) * C
        patch = th * W * 9 * C
        return (2 * tile * x_itemsize            # input tile, double-buffered
                + 4 * halo * x_itemsize          # two halos, double-buffered
                + 2 * tile * x_itemsize          # output tile, double-buffered
                + band * band_itemsize           # padded band scratch
                + patch * band_itemsize          # im2col patch (compiler temp)
                + 3 * tile * 4                   # f32 dot result + epilogue temps
                + 2 * 9 * C * C * band_itemsize  # weights (double-buffered)
                + 2 * C * 4)                     # bias

    cands = [t for t in range(H, 0, -1) if H % t == 0 and t % d == 0]
    fitting = [t for t in cands if footprint(t) <= budget_bytes]
    if not fitting:
        fitting = [cands[-1]]                    # best effort: smallest tile
    if N < 2:
        # Keep the second TensorCore busy (v7x) even for a single image.
        multi = [t for t in fitting if H // t >= 2]
        if multi:
            fitting = multi
    # Prefer TH*W % 8 == 0 so the (TH*W, C) <-> (TH, W, C) reshapes are
    # layout-preserving (no sublane relayouts).
    aligned = [t for t in fitting if (t * W) % 8 == 0]
    if aligned:
        fitting = aligned
    return fitting[0]                            # largest remaining candidate


def resconv_forward(x_nchw, weight_oihw, bias, beta, dilation=1,
                    row_tile=None, mxu_dtype=jnp.bfloat16):
    """x_nchw: (N,C,H,W); weight_oihw: (C,C,3,3); bias: (C,);
    beta: (C,) or (1,C,1,1) (PyTorch parameter shape).

    mxu_dtype=jnp.bfloat16 (default) runs the matmul at native MXU rate on
    v6e/v7x; pass mxu_dtype=None for an f32-exact path."""
    N, C, H, W = x_nchw.shape
    d = int(dilation)
    assert weight_oihw.shape == (C, C, 3, 3)
    bias = jnp.asarray(bias).reshape(-1)
    beta = jnp.asarray(beta).reshape(-1)
    assert bias.shape == (C,) and beta.shape == (C,)
    if H % d != 0:
        # TODO(synk): general halo tiling when dilation does not divide H.
        raise ValueError("dilation must divide H for the tiled kernel")

    x_itemsize = jnp.dtype(x_nchw.dtype).itemsize
    compute_dtype = x_nchw.dtype if mxu_dtype is None else mxu_dtype
    band_itemsize = jnp.dtype(compute_dtype).itemsize

    cap = _vmem_capacity_bytes()
    budget = cap // 2                    # ~32 MiB on v7x, ~64 MiB on v5e/v6e
    vmem_limit = (cap * 3) // 4          # ~48 MiB on v7x, ~96 MiB on v5e/v6e

    if row_tile is not None:
        TH = int(row_tile)
        if H % TH or TH % d:
            raise ValueError("row_tile must divide H and be a multiple of dilation")
    else:
        TH = _choose_row_tile(N, H, W, C, d, x_itemsize, band_itemsize, budget)
    n_tiles = H // TH
    r = TH // d          # halo block-index stride (halo blocks are d rows)
    hb = H // d          # number of d-row blocks along H

    x = jnp.transpose(x_nchw, (0, 2, 3, 1))                 # NCHW -> NHWC

    # Fold beta into weight and bias:  conv(x)*beta + x == conv_beta(x) + x.
    # im2col weight layout: K index = (kh*3 + kw)*C + ci, matching the kernel.
    w_r = jnp.transpose(weight_oihw, (2, 3, 1, 0)).reshape(9 * C, C)  # (9C, Co)
    w_r = (w_r * beta.reshape(1, C)).astype(compute_dtype)
    b_r = (bias * beta).reshape(1, C).astype(jnp.float32)

    kernel = functools.partial(_resconv_kernel, TH=TH, W=W, C=C, d=d,
                               n_tiles=n_tiles)

    out_nhwc = pl.pallas_call(
        kernel,
        out_shape=jax.ShapeDtypeStruct((N, H, W, C), x.dtype),
        grid_spec=pltpu.PrefetchScalarGridSpec(
            num_scalar_prefetch=0,
            grid=(N, n_tiles),
            in_specs=[
                # main row tile (also used as the residual)
                pl.BlockSpec((1, TH, W, C), lambda n, i: (n, i, 0, 0)),
                # d rows above the tile (clamped at the image top; zeroed in-kernel)
                pl.BlockSpec((1, d, W, C),
                             lambda n, i: (n, jnp.maximum(i * r - 1, 0), 0, 0)),
                # d rows below the tile (clamped at the image bottom)
                pl.BlockSpec((1, d, W, C),
                             lambda n, i: (n, jnp.minimum((i + 1) * r, hb - 1), 0, 0)),
                # grid-invariant weights / bias
                pl.BlockSpec((9 * C, C), lambda n, i: (0, 0)),
                pl.BlockSpec((1, C), lambda n, i: (0, 0)),
            ],
            out_specs=pl.BlockSpec((1, TH, W, C), lambda n, i: (n, i, 0, 0)),
            scratch_shapes=[
                pltpu.VMEM((TH + 2 * d, W + 2 * d, C), compute_dtype),  # padded band
            ],
        ),
        compiler_params=pltpu.CompilerParams(
            dimension_semantics=("parallel", "parallel"),
            vmem_limit_bytes=int(vmem_limit)),
    )(x, x, x, w_r, b_r)

    return jnp.transpose(out_nhwc, (0, 3, 1, 2))             # back to NCHW


def _reference(x_nchw, weight_oihw, bias, beta, dilation=1):
    d = int(dilation)
    C = x_nchw.shape[1]
    conv = jax.lax.conv_general_dilated(
        x_nchw, weight_oihw, window_strides=(1, 1),
        padding=((d, d), (d, d)), rhs_dilation=(d, d),
        dimension_numbers=('NCHW', 'OIHW', 'NCHW'))
    conv = conv + bias.reshape(1, C, 1, 1)
    y = conv * jnp.asarray(beta).reshape(1, C, 1, 1) + x_nchw
    return jnp.where(y >= 0, y, 0.2 * y)


if __name__ == "__main__":
    key = jax.random.PRNGKey(0)
    N, C, H, W = 2, 4, 16, 16

    kx, kw_, kb, kbeta = jax.random.split(key, 4)
    x = jax.random.normal(kx, (N, C, H, W), jnp.float32)
    weight = jax.random.normal(kw_, (C, C, 3, 3), jnp.float32) * 0.1
    bias = jax.random.normal(kb, (C,), jnp.float32) * 0.1
    # PyTorch init is ones((1,c,1,1)); perturb so the beta-folding path is
    # exercised, keeping the (1,C,1,1) parameter shape.
    beta = 1.0 + 0.1 * jax.random.normal(kbeta, (1, C, 1, 1), jnp.float32)

    for dil in (1, 2):
        ref = jax.block_until_ready(
            _reference(x, weight, bias, beta, dilation=dil))

        # Exact f32 MXU path: tight tolerance.
        out = jax.block_until_ready(
            resconv_forward(x, weight, bias, beta, dilation=dil, mxu_dtype=None))
        assert out.shape == (N, C, H, W)
        err = float(jnp.max(jnp.abs(out - ref)))
        assert jnp.allclose(out, ref, atol=1e-4, rtol=1e-4), (dil, "f32", err)

        # Production default (bf16 MXU): looser tolerance by design.
        out_bf = jax.block_until_ready(
            resconv_forward(x, weight, bias, beta, dilation=dil))
        err_bf = float(jnp.max(jnp.abs(out_bf - ref)))
        assert jnp.allclose(out_bf, ref, atol=5e-2, rtol=5e-2), (dil, "bf16", err_bf)

    print("KERNEL_OK")
</pallas_src>

<mosaic_0001>
module attributes {stable_mosaic.version = 11 : i64} {
  func.func @_resconv_kernel(%arg0: i32, %arg1: i32, %arg2: memref<1x16x16x4xf32, #tpu.memory_space<vmem>>, %arg3: memref<1x1x16x4xf32, #tpu.memory_space<vmem>>, %arg4: memref<1x1x16x4xf32, #tpu.memory_space<vmem>>, %arg5: memref<36x4xf32, #tpu.memory_space<vmem>>, %arg6: memref<1x4xf32, #tpu.memory_space<vmem>>, %arg7: memref<1x16x16x4xf32, #tpu.memory_space<vmem>>, %arg8: memref<18x18x4xf32, #tpu.memory_space<vmem>>) attributes {dimension_semantics = [#tpu.dimension_semantics<parallel>, #tpu.dimension_semantics<parallel>], iteration_bounds = array<i64: 2, 1>, scalar_prefetch = 0 : i64, scratch_operands = 1 : i64, tpu.core_type = #tpu.core_type<tc>, window_params = [{transform_indices = @transform_0, window_bounds = array<i64: 1, 16, 16, 4>}, {transform_indices = @transform_1, window_bounds = array<i64: 1, 1, 16, 4>}, {transform_indices = @transform_2, window_bounds = array<i64: 1, 1, 16, 4>}, {pipeline_mode = #tpu.pipeline_mode<synchronous>, transform_indices = @transform_3, window_bounds = array<i64: 36, 4>}, {pipeline_mode = #tpu.pipeline_mode<synchronous>, transform_indices = @transform_4, window_bounds = array<i64: 1, 4>}, {transform_indices = @transform_5, window_bounds = array<i64: 1, 16, 16, 4>}]} {
    %cst = arith.constant 0.000000e+00 : f32
    %0 = vector.broadcast %cst : f32 to vector<18x1x4xf32>
    %c0 = arith.constant 0 : index
    %c0_0 = arith.constant 0 : index
    %c0_1 = arith.constant 0 : index
    %1 = vector.load %arg8[%c0, %c0_0, %c0_1] : memref<18x18x4xf32, #tpu.memory_space<vmem>>, vector<18x1x4xf32>
    tpu.vector_store %arg8[%c0, %c0_0, %c0_1], %0 {strides = array<i32>} : memref<18x18x4xf32, #tpu.memory_space<vmem>>, vector<18x1x4xf32>,
    %cst_2 = arith.constant 0.000000e+00 : f32
    %2 = vector.broadcast %cst_2 : f32 to vector<18x1x4xf32>
    %c0_3 = arith.constant 0 : index
    %c17 = arith.constant 17 : index
    %c0_4 = arith.constant 0 : index
    %3 = vector.load %arg8[%c0_3, %c17, %c0_4] : memref<18x18x4xf32, #tpu.memory_space<vmem>>, vector<18x1x4xf32>
    tpu.vector_store %arg8[%c0_3, %c17, %c0_4], %2 {strides = array<i32>} : memref<18x18x4xf32, #tpu.memory_space<vmem>>, vector<18x1x4xf32>,
    %c0_5 = arith.constant 0 : index
    %c0_6 = arith.constant 0 : index
    %c0_7 = arith.constant 0 : index
    %c0_8 = arith.constant 0 : index
    %4 = vector.load %arg2[%c0_5, %c0_6, %c0_7, %c0_8] : memref<1x16x16x4xf32, #tpu.memory_space<vmem>>, vector<1x16x16x4xf32>
    %5 = vector.shape_cast %4 : vector<1x16x16x4xf32> to vector<16x16x4xf32>
    %c1 = arith.constant 1 : index
    %c1_9 = arith.constant 1 : index
    %c0_10 = arith.constant 0 : index
    %6 = vector.load %arg8[%c1, %c1_9, %c0_10] : memref<18x18x4xf32, #tpu.memory_space<vmem>>, vector<16x16x4xf32>
    tpu.vector_store %arg8[%c1, %c1_9, %c0_10], %5 {strides = array<i32>} : memref<18x18x4xf32, #tpu.memory_space<vmem>>, vector<16x16x4xf32>,
    %c0_i32 = arith.constant 0 : i32
    %7 = arith.cmpi sgt, %arg1, %c0_i32 : i32
    %8 = arith.extui %7 : i1 to i32
    %c0_i32_11 = arith.constant 0 : i32
    %9 = arith.cmpi ne, %8, %c0_i32_11 : i32
    scf.if %9 {
      %c0_59 = arith.constant 0 : index
      %c0_60 = arith.constant 0 : index
      %c0_61 = arith.constant 0 : index
      %c0_62 = arith.constant 0 : index
      %47 = vector.load %arg3[%c0_59, %c0_60, %c0_61, %c0_62] : memref<1x1x16x4xf32, #tpu.memory_space<vmem>>, vector<1x1x16x4xf32>
      %48 = vector.shape_cast %47 : vector<1x1x16x4xf32> to vector<1x16x4xf32>
      %c0_63 = arith.constant 0 : index
      %c1_64 = arith.constant 1 : index
      %c0_65 = arith.constant 0 : index
      %49 = vector.load %arg8[%c0_63, %c1_64, %c0_65] : memref<18x18x4xf32, #tpu.memory_space<vmem>>, vector<1x16x4xf32>
      tpu.vector_store %arg8[%c0_63, %c1_64, %c0_65], %48 {strides = array<i32>} : memref<18x18x4xf32, #tpu.memory_space<vmem>>, vector<1x16x4xf32>,
    } else {
    }
    %c0_i32_12 = arith.constant 0 : i32
    %10 = arith.cmpi eq, %arg1, %c0_i32_12 : i32
    %11 = arith.extui %10 : i1 to i32
    %c0_i32_13 = arith.constant 0 : i32
    %12 = arith.cmpi ne, %11, %c0_i32_13 : i32
    scf.if %12 {
      %cst_59 = arith.constant 0.000000e+00 : f32
      %47 = vector.broadcast %cst_59 : f32 to vector<1x16x4xf32>
      %c0_60 = arith.constant 0 : index
      %c1_61 = arith.constant 1 : index
      %c0_62 = arith.constant 0 : index
      %48 = vector.load %arg8[%c0_60, %c1_61, %c0_62] : memref<18x18x4xf32, #tpu.memory_space<vmem>>, vector<1x16x4xf32>
      tpu.vector_store %arg8[%c0_60, %c1_61, %c0_62], %47 {strides = array<i32>} : memref<18x18x4xf32, #tpu.memory_space<vmem>>, vector<1x16x4xf32>,
    } else {
    }
    %c0_i32_14 = arith.constant 0 : i32
    %13 = arith.cmpi slt, %arg1, %c0_i32_14 : i32
    %14 = arith.extui %13 : i1 to i32
    %c0_i32_15 = arith.constant 0 : i32
    %15 = arith.cmpi ne, %14, %c0_i32_15 : i32
    scf.if %15 {
      %c0_59 = arith.constant 0 : index
      %c0_60 = arith.constant 0 : index
      %c0_61 = arith.constant 0 : index
      %c0_62 = arith.constant 0 : index
      %47 = vector.load %arg4[%c0_59, %c0_60, %c0_61, %c0_62] : memref<1x1x16x4xf32, #tpu.memory_space<vmem>>, vector<1x1x16x4xf32>
      %48 = vector.shape_cast %47 : vector<1x1x16x4xf32> to vector<1x16x4xf32>
      %c17_63 = arith.constant 17 : index
      %c1_64 = arith.constant 1 : index
      %c0_65 = arith.constant 0 : index
      %49 = vector.load %arg8[%c17_63, %c1_64, %c0_65] : memref<18x18x4xf32, #tpu.memory_space<vmem>>, vector<1x16x4xf32>
      tpu.vector_store %arg8[%c17_63, %c1_64, %c0_65], %48 {strides = array<i32>} : memref<18x18x4xf32, #tpu.memory_space<vmem>>, vector<1x16x4xf32>,
    } else {
    }
    %c0_i32_16 = arith.constant 0 : i32
    %16 = arith.cmpi eq, %arg1, %c0_i32_16 : i32
    %17 = arith.extui %16 : i1 to i32
    %c0_i32_17 = arith.constant 0 : i32
    %18 = arith.cmpi ne, %17, %c0_i32_17 : i32
    scf.if %18 {
      %cst_59 = arith.constant 0.000000e+00 : f32
      %47 = vector.broadcast %cst_59 : f32 to vector<1x16x4xf32>
      %c17_60 = arith.constant 17 : index
      %c1_61 = arith.constant 1 : index
      %c0_62 = arith.constant 0 : index
      %48 = vector.load %arg8[%c17_60, %c1_61, %c0_62] : memref<18x18x4xf32, #tpu.memory_space<vmem>>, vector<1x16x4xf32>
      tpu.vector_store %arg8[%c17_60, %c1_61, %c0_62], %47 {strides = array<i32>} : memref<18x18x4xf32, #tpu.memory_space<vmem>>, vector<1x16x4xf32>,
    } else {
    }
    %c0_18 = arith.constant 0 : index
    %c0_19 = arith.constant 0 : index
    %c0_20 = arith.constant 0 : index
    %19 = vector.load %arg8[%c0_18, %c0_19, %c0_20] : memref<18x18x4xf32, #tpu.memory_space<vmem>>, vector<16x16x4xf32>
    %c0_21 = arith.constant 0 : index
    %c1_22 = arith.constant 1 : index
    %c0_23 = arith.constant 0 : index
    %20 = vector.load %arg8[%c0_21, %c1_22, %c0_23] : memref<18x18x4xf32, #tpu.memory_space<vmem>>, vector<16x16x4xf32>
    %c0_24 = arith.constant 0 : index
    %c2 = arith.constant 2 : index
    %c0_25 = arith.constant 0 : index
    %21 = vector.load %arg8[%c0_24, %c2, %c0_25] : memref<18x18x4xf32, #tpu.memory_space<vmem>>, vector<16x16x4xf32>
    %c1_26 = arith.constant 1 : index
    %c0_27 = arith.constant 0 : index
    %c0_28 = arith.constant 0 : index
    %22 = vector.load %arg8[%c1_26, %c0_27, %c0_28] : memref<18x18x4xf32, #tpu.memory_space<vmem>>, vector<16x16x4xf32>
    %c1_29 = arith.constant 1 : index
    %c1_30 = arith.constant 1 : index
    %c0_31 = arith.constant 0 : index
    %23 = vector.load %arg8[%c1_29, %c1_30, %c0_31] : memref<18x18x4xf32, #tpu.memory_space<vmem>>, vector<16x16x4xf32>
    %c1_32 = arith.constant 1 : index
    %c2_33 = arith.constant 2 : index
    %c0_34 = arith.constant 0 : index
    %24 = vector.load %arg8[%c1_32, %c2_33, %c0_34] : memref<18x18x4xf32, #tpu.memory_space<vmem>>, vector<16x16x4xf32>
    %c2_35 = arith.constant 2 : index
    %c0_36 = arith.constant 0 : index
    %c0_37 = arith.constant 0 : index
    %25 = vector.load %arg8[%c2_35, %c0_36, %c0_37] : memref<18x18x4xf32, #tpu.memory_space<vmem>>, vector<16x16x4xf32>
    %c2_38 = arith.constant 2 : index
    %c1_39 = arith.constant 1 : index
    %c0_40 = arith.constant 0 : index
    %26 = vector.load %arg8[%c2_38, %c1_39, %c0_40] : memref<18x18x4xf32, #tpu.memory_space<vmem>>, vector<16x16x4xf32>
    %c2_41 = arith.constant 2 : index
    %c2_42 = arith.constant 2 : index
    %c0_43 = arith.constant 0 : index
    %27 = vector.load %arg8[%c2_41, %c2_42, %c0_43] : memref<18x18x4xf32, #tpu.memory_space<vmem>>, vector<16x16x4xf32>
    %28 = tpu.concatenate %19, %20, %21, %22, %23, %24, %25, %26, %27 in 2 : vector<16x16x4xf32>, vector<16x16x4xf32>, vector<16x16x4xf32>, vector<16x16x4xf32>, vector<16x16x4xf32>, vector<16x16x4xf32>, vector<16x16x4xf32>, vector<16x16x4xf32>, vector<16x16x4xf32> -> vector<16x16x36xf32>
    %29 = vector.shape_cast %28 : vector<16x16x36xf32> to vector<256x36xf32>
    %c0_44 = arith.constant 0 : index
    %c0_45 = arith.constant 0 : index
    %30 = vector.load %arg5[%c0_44, %c0_45] : memref<36x4xf32, #tpu.memory_space<vmem>>, vector<36x4xf32>
    %cst_46 = arith.constant dense<0.000000e+00> : vector<256x4xf32>
    %31 = tpu.matmul %29, %30, %cst_46 {dimension_numbers = #tpu.dot_dimension_numbers<[1], [0], [0], [1], [0, 0, 1, 1], [], []>} : vector<256x36xf32>, vector<36x4xf32>, vector<256x4xf32> -> vector<256x4xf32>
    %c0_47 = arith.constant 0 : index
    %c0_48 = arith.constant 0 : index
    %32 = vector.load %arg6[%c0_47, %c0_48] : memref<1x4xf32, #tpu.memory_space<vmem>>, vector<1x4xf32>
    %33 = vector.broadcast %32 : vector<1x4xf32> to vector<256x4xf32>
    %34 = arith.addf %31, %33 : vector<256x4xf32>
    %35 = vector.shape_cast %34 : vector<256x4xf32> to vector<16x16x4xf32>
    %c0_49 = arith.constant 0 : index
    %c0_50 = arith.constant 0 : index
    %c0_51 = arith.constant 0 : index
    %c0_52 = arith.constant 0 : index
    %36 = vector.load %arg2[%c0_49, %c0_50, %c0_51, %c0_52] : memref<1x16x16x4xf32, #tpu.memory_space<vmem>>, vector<1x16x16x4xf32>
    %37 = vector.shape_cast %36 : vector<1x16x16x4xf32> to vector<16x16x4xf32>
    %38 = arith.addf %35, %37 : vector<16x16x4xf32>
    %cst_53 = arith.constant 0.000000e+00 : f32
    %39 = vector.broadcast %cst_53 : f32 to vector<16x16x4xf32>
    %40 = arith.cmpf oge, %38, %39 : vector<16x16x4xf32>
    %cst_54 = arith.constant 2.000000e-01 : f32
    %41 = vector.broadcast %cst_54 : f32 to vector<16x16x4xf32>
    %42 = arith.mulf %41, %38 : vector<16x16x4xf32>
    %43 = arith.select %40, %38, %42 : vector<16x16x4xi1>, vector<16x16x4xf32>
    %c0_55 = arith.constant 0 : index
    %c0_56 = arith.constant 0 : index
    %c0_57 = arith.constant 0 : index
    %c0_58 = arith.constant 0 : index
    %44 = vector.load %arg7[%c0_55, %c0_56, %c0_57, %c0_58] : memref<1x16x16x4xf32, #tpu.memory_space<vmem>>, vector<1x16x16x4xf32>
    %45 = vector.shape_cast %44 : vector<1x16x16x4xf32> to vector<16x16x4xf32>
    %46 = vector.shape_cast %43 : vector<16x16x4xf32> to vector<1x16x16x4xf32>
    tpu.vector_store %arg7[%c0_55, %c0_56, %c0_57, %c0_58], %46 {strides = array<i32>} : memref<1x16x16x4xf32, #tpu.memory_space<vmem>>, vector<1x16x16x4xf32>,
    return
  }
  func.func @transform_0(%arg0: i32, %arg1: i32) -> (i32, i32, i32, i32) {
    %c0_i32 = arith.constant 0 : i32
    %c0_i32_0 = arith.constant 0 : i32
    %c0_i32_1 = arith.constant 0 : i32
    return %arg0, %arg1, %c0_i32, %c0_i32_0 : i32, i32, i32, i32
  }
  func.func @transform_1(%arg0: i32, %arg1: i32) -> (i32, i32, i32, i32) {
    %c16_i32 = arith.constant 16 : i32
    %0 = arith.muli %arg1, %c16_i32 : i32
    %c1_i32 = arith.constant 1 : i32
    %1 = arith.subi %0, %c1_i32 : i32
    %c0_i32 = arith.constant 0 : i32
    %2 = arith.maxsi %1, %c0_i32 : i32
    %c0_i32_0 = arith.constant 0 : i32
    %c0_i32_1 = arith.constant 0 : i32
    %c0_i32_2 = arith.constant 0 : i32
    return %arg0, %2, %c0_i32_0, %c0_i32_1 : i32, i32, i32, i32
  }
  func.func @transform_2(%arg0: i32, %arg1: i32) -> (i32, i32, i32, i32) {
    %c1_i32 = arith.constant 1 : i32
    %0 = arith.addi %arg1, %c1_i32 : i32
    %c16_i32 = arith.constant 16 : i32
    %1 = arith.muli %0, %c16_i32 : i32
    %c15_i32 = arith.constant 15 : i32
    %2 = arith.minsi %1, %c15_i32 : i32
    %c0_i32 = arith.constant 0 : i32
    %c0_i32_0 = arith.constant 0 : i32
    %c0_i32_1 = arith.constant 0 : i32
    return %arg0, %2, %c0_i32, %c0_i32_0 : i32, i32, i32, i32
  }
  func.func @transform_3(%arg0: i32, %arg1: i32) -> (i32, i32) {
    %c0_i32 = arith.constant 0 : i32
    %c0_i32_0 = arith.constant 0 : i32
    %c0_i32_1 = arith.constant 0 : i32
    return %c0_i32, %c0_i32_0 : i32, i32
  }
  func.func @transform_4(%arg0: i32, %arg1: i32) -> (i32, i32) {
    %c0_i32 = arith.constant 0 : i32
    %c0_i32_0 = arith.constant 0 : i32
    %c0_i32_1 = arith.constant 0 : i32
    return %c0_i32, %c0_i32_0 : i32, i32
  }
  func.func @transform_5(%arg0: i32, %arg1: i32) -> (i32, i32, i32, i32) {
    %c0_i32 = arith.constant 0 : i32
    %c0_i32_0 = arith.constant 0 : i32
    %c0_i32_1 = arith.constant 0 : i32
    return %arg0, %arg1, %c0_i32, %c0_i32_0 : i32, i32, i32, i32
  }
}

</mosaic_0001>

<llo_original>
// kernel: tpu_custom_call.1
$region0: #{tpu_custom_call.1}
  #allocation0 [shape = 'u32[]', space=smem, size = 0x4, offset = 0x4, fixed_abs, tag = 'smem constant byte address 0x4 - core index']
  #allocation1 [shape = 'u32[144,128]{1,0:T(1,128)}', space=vmem, size = 0x12000, scoped, tag = 'internal scratch']
  #allocation2 [shape = 'f32[18,18,4]{2,1,0:T(8,128)}', space=vmem, size = 0x36000, scoped, tag = 'scratch operand']
  %s0 = inlined_call_operand.vmem [shape: f32[2,16,16,4], index: 0, kind: input, shape index: {}]
  %s1 = inlined_call_operand.vmem [shape: f32[2,16,16,4], index: 1, kind: input, shape index: {}]
  %s2 = inlined_call_operand.vmem [shape: f32[2,16,16,4], index: 2, kind: input, shape index: {}]
  %s3 = inlined_call_operand.vmem [shape: f32[36,4], index: 3, kind: input, shape index: {}]
  %s4 = inlined_call_operand.vmem [shape: f32[1,4], index: 4, kind: input, shape index: {}]
  %s5 = inlined_call_operand.vmem [shape: f32[2,16,16,4], index: 5, kind: output, shape index: {}]
  %s6 = sld [smem:[#allocation0]]
  $region69: #{tpu_custom_call.1} parent=0
    _
  %s8 = ssub.s32 1, %s6
  %s9 = scalar_select 0, %s8, %s6
  loop: start=0, step=1, limit=4
  $region2: #{tpu_custom_call.1} parent=0 // loop_pre_header
    _
  $region3: #{tpu_custom_call.1} parent=0 // loop_header
    %s11 = sphi 0, %s15
    %p12 = scmp.ge.s32.totalorder %s11, 4
    %s18 = sphi 0, %s30
    %s19 = sphi 0, %s26
    %s20 = sphi 0, %s18
    %s21 = sphi 0, %s19
    %s22 = sphi 0, %s20
    %s23 = sphi 0, %s21
    %s35 = sphi 0, %s37
    %s38 = sphi 0, %s35
    %s39 = sphi 0, %s38
    %s55 = sphi 0, %s39
    %s71 = sphi 0, %s73
    %s74 = sphi 0, %s71
    %s75 = sphi 0, %s74
    %s91 = sphi 0, %s75
    %s107 = sphi 0, %s109
    %s110 = sphi 0, %s107
    %s111 = sphi 0, %s110
    %s127 = sphi 0, %s111
    %s131 = sphi 0, %s131
    %s133 = sphi 0, %s131
    %s134 = sphi 0, %s133
    %s148 = sphi 0, %s134
    %s152 = sphi 0, %s152
    %s154 = sphi 0, %s152
    %s155 = sphi 0, %s154
    %s169 = sphi 0, %s155
    %s177 = sphi 0, %s179
    %s180 = sphi 0, %s177
    %s181 = sphi 0, %s180
    %s197 = sphi 0, %s181
  $region4: #{tpu_custom_call.1} parent=0 // loop_header_branch
    %14 = sbr.rel (%p12) target = $region8
  $region5: #{tpu_custom_call.1} parent=0 // loop_body
    %s16 = ssub.s32 %s11, 1
    %s17 = ssub.s32 %s11, 2
    %s24 = sadd.s32 1, %s19
    %p25 = scmp.ge.s32.totalorder %s24, 1
    %s26 = scalar_select %p25, 0, %s24
    %s27 = sadd.s32 1, %s18
    %s28 = scalar_select %p25, %s27, %s18
    %p29 = scmp.ge.s32.totalorder %s28, 2
    %s30 = scalar_select %p29, 0, %s28
    %s31 = ssub.s32 %s18, %s30
    %s32 = ssub.s32 %s19, %s26
    %s33 = sor.u32 %s31, %s32
    %p34 = scmp.eq.s32.totalorder %s33, 0
    %s36 = sadd.s32 %s35, 1
    %s37 = scalar_select %p34, %s35, %s36
    %p40 = pneg %p34
    %p41 = scmp.eq.s32.totalorder %s11, 1
    %p42 = por %p40, %p41
    %p43 = scmp.ne.s32.totalorder %s35, %s38
    %p44 = scmp.eq.s32.totalorder %s11, 0
    %p45 = por %p43, %p44
    %p46 = scmp.ne.s32.totalorder %s35, %s38
    %p47 = scmp.eq.s32.totalorder %s16, 1
    %p48 = por %p46, %p47
    %p49 = scmp.ne.s32.totalorder %s38, %s39
    %p50 = scmp.eq.s32.totalorder %s16, 0
    %p51 = por %p49, %p50
    %p52 = scmp.ne.s32.totalorder %s38, %s39
    %p53 = scmp.eq.s32.totalorder %s17, 1
    %p54 = por %p52, %p53
    %p56 = scmp.ne.s32.totalorder %s39, %s55
    %p57 = scmp.eq.s32.totalorder %s17, 0
    %p58 = por %p56, %p57
    %s59 = smul.u32 %s19, 16
    %s60 = ssub.s32 %s59, 1
    %p61 = scmp.gt.s32.totalorder %s60, 0
    %s62 = scalar_select %p61, %s60, 0
    %s63 = smul.u32 %s26, 16
    %s64 = ssub.s32 %s63, 1
    %p65 = scmp.gt.s32.totalorder %s64, 0
    %s66 = scalar_select %p65, %s64, 0
    %s67 = ssub.s32 %s18, %s30
    %s68 = ssub.s32 %s62, %s66
    %s69 = sor.u32 %s67, %s68
    %p70 = scmp.eq.s32.totalorder %s69, 0
    %s72 = sadd.s32 %s71, 1
    %s73 = scalar_select %p70, %s71, %s72
    %p76 = pneg %p70
    %p77 = scmp.eq.s32.totalorder %s11, 1
    %p78 = por %p76, %p77
    %p79 = scmp.ne.s32.totalorder %s71, %s74
    %p80 = scmp.eq.s32.totalorder %s11, 0
    %p81 = por %p79, %p80
    %p82 = scmp.ne.s32.totalorder %s71, %s74
    %p83 = scmp.eq.s32.totalorder %s16, 1
    %p84 = por %p82, %p83
    %p85 = scmp.ne.s32.totalorder %s74, %s75
    %p86 = scmp.eq.s32.totalorder %s16, 0
    %p87 = por %p85, %p86
    %p88 = scmp.ne.s32.totalorder %s74, %s75
    %p89 = scmp.eq.s32.totalorder %s17, 1
    %p90 = por %p88, %p89
    %p92 = scmp.ne.s32.totalorder %s75, %s91
    %p93 = scmp.eq.s32.totalorder %s17, 0
    %p94 = por %p92, %p93
    %s95 = sadd.s32 %s19, 1
    %s96 = smul.u32 %s95, 16
    %p97 = scmp.lt.s32.totalorder %s96, 15
    %s98 = scalar_select %p97, %s96, 15
    %s99 = sadd.s32 %s26, 1
    %s100 = smul.u32 %s99, 16
    %p101 = scmp.lt.s32.totalorder %s100, 15
    %s102 = scalar_select %p101, %s100, 15
    %s103 = ssub.s32 %s18, %s30
    %s104 = ssub.s32 %s98, %s102
    %s105 = sor.u32 %s103, %s104
    %p106 = scmp.eq.s32.totalorder %s105, 0
    %s108 = sadd.s32 %s107, 1
    %s109 = scalar_select %p106, %s107, %s108
    %p112 = pneg %p106
    %p113 = scmp.eq.s32.totalorder %s11, 1
    %p114 = por %p112, %p113
    %p115 = scmp.ne.s32.totalorder %s107, %s110
    %p116 = scmp.eq.s32.totalorder %s11, 0
    %p117 = por %p115, %p116
    %p118 = scmp.ne.s32.totalorder %s107, %s110
    %p119 = scmp.eq.s32.totalorder %s16, 1
    %p120 = por %p118, %p119
    %p121 = scmp.ne.s32.totalorder %s110, %s111
    %p122 = scmp.eq.s32.totalorder %s16, 0
    %p123 = por %p121, %p122
    %p124 = scmp.ne.s32.totalorder %s110, %s111
    %p125 = scmp.eq.s32.totalorder %s17, 1
    %p126 = por %p124, %p125
    %p128 = scmp.ne.s32.totalorder %s111, %s127
    %p129 = scmp.eq.s32.totalorder %s17, 0
    %p130 = por %p128, %p129
    %s132 = sadd.s32 %s131, 1
    %p135 = scmp.eq.s32.totalorder %s11, 1
    %p136 = scmp.ne.s32.totalorder %s131, %s133
    %p137 = scmp.eq.s32.totalorder %s11, 0
    %p138 = por %p136, %p137
    %p139 = scmp.ne.s32.totalorder %s131, %s133
    %p140 = scmp.eq.s32.totalorder %s16, 1
    %p141 = por %p139, %p140
    %p142 = scmp.ne.s32.totalorder %s133, %s134
    %p143 = scmp.eq.s32.totalorder %s16, 0
    %p144 = por %p142, %p143
    %p145 = scmp.ne.s32.totalorder %s133, %s134
    %p146 = scmp.eq.s32.totalorder %s17, 1
    %p147 = por %p145, %p146
    %p149 = scmp.ne.s32.totalorder %s134, %s148
    %p150 = scmp.eq.s32.totalorder %s17, 0
    %p151 = por %p149, %p150
    %s153 = sadd.s32 %s152, 1
    %p156 = scmp.eq.s32.totalorder %s11, 1
    %p157 = scmp.ne.s32.totalorder %s152, %s154
    %p158 = scmp.eq.s32.totalorder %s11, 0
    %p159 = por %p157, %p158
    %p160 = scmp.ne.s32.totalorder %s152, %s154
    %p161 = scmp.eq.s32.totalorder %s16, 1
    %p162 = por %p160, %p161
    %p163 = scmp.ne.s32.totalorder %s154, %s155
    %p164 = scmp.eq.s32.totalorder %s16, 0
    %p165 = por %p163, %p164
    %p166 = scmp.ne.s32.totalorder %s154, %s155
    %p167 = scmp.eq.s32.totalorder %s17, 1
    %p168 = por %p166, %p167
    %p170 = scmp.ne.s32.totalorder %s155, %s169
    %p171 = scmp.eq.s32.totalorder %s17, 0
    %p172 = por %p170, %p171
    %s173 = ssub.s32 %s18, %s30
    %s174 = ssub.s32 %s19, %s26
    %s175 = sor.u32 %s173, %s174
    %p176 = scmp.eq.s32.totalorder %s175, 0
    %s178 = sadd.s32 %s177, 1
    %s179 = scalar_select %p176, %s177, %s178
    %p182 = pneg %p176
    %p183 = scmp.eq.s32.totalorder %s11, 1
    %p184 = por %p182, %p183
    %p185 = scmp.ne.s32.totalorder %s177, %s180
    %p186 = scmp.eq.s32.totalorder %s11, 0
    %p187 = por %p185, %p186
    %p188 = scmp.ne.s32.totalorder %s177, %s180
    %p189 = scmp.eq.s32.totalorder %s16, 1
    %p190 = por %p188, %p189
    %p191 = scmp.ne.s32.totalorder %s180, %s181
    %p192 = scmp.eq.s32.totalorder %s16, 0
    %p193 = por %p191, %p192
    %p194 = scmp.ne.s32.totalorder %s180, %s181
    %p195 = scmp.eq.s32.totalorder %s17, 1
    %p196 = por %p194, %p195
    %p198 = scmp.ne.s32.totalorder %s181, %s197
    %p199 = scmp.eq.s32.totalorder %s17, 0
    %p200 = por %p198, %p199
    %p201 = scmp.le.s32.totalorder 1, %s11
    %p202 = scmp.lt.s32.totalorder %s11, 3
    %p203 = pnand %p201, %p202
    %p204 = pneg %p203
    // Predicated region
    $region9: #{tpu_custom_call.1} parent=5 // pred_check
      _
    $region10: #{tpu_custom_call.1} parent=5 // pred_check_branch
      %206 = sbr.rel (%p203) target = $region12
    $region11: #{tpu_custom_call.1} parent=5 // pred_region
      %s207 = ssub.s32 %s11, 1
      // Predicated region
      $region13: #{tpu_custom_call.1} parent=11 // pred_check
        %p208 = pneg %p144
      $region14: #{tpu_custom_call.1} parent=11 // pred_check_branch
        %210 = sbr.rel (%p208) target = $region16
      $region15: #{tpu_custom_call.1} parent=11 // pred_region
        _
      $region16: #{tpu_custom_call.1} parent=11 // pred_fallthru
        _
      // Predicated region
      $region17: #{tpu_custom_call.1} parent=11 // pred_check
        %p211 = pneg %p165
      $region18: #{tpu_custom_call.1} parent=11 // pred_check_branch
        %213 = sbr.rel (%p211) target = $region20
      $region19: #{tpu_custom_call.1} parent=11 // pred_region
        _
      $region20: #{tpu_custom_call.1} parent=11 // pred_fallthru
        _
    $region12: #{tpu_custom_call.1} parent=5 // pred_fallthru
      _
    %p214 = scmp.lt.s32.totalorder %s11, 2
    // Predicated region
    $region21: #{tpu_custom_call.1} parent=5 // pred_check
      %p215 = pneg %p214
    $region22: #{tpu_custom_call.1} parent=5 // pred_check_branch
      %217 = sbr.rel (%p215) target = $region24
    $region23: #{tpu_custom_call.1} parent=5 // pred_region
      // Predicated region
      $region25: #{tpu_custom_call.1} parent=23 // pred_check
        %p218 = pneg %p45
      $region26: #{tpu_custom_call.1} parent=23 // pred_check_branch
        %220 = sbr.rel (%p218) target = $region28
      $region27: #{tpu_custom_call.1} parent=23 // pred_region
        %s221 = smul.u32 16, %s19
        %p222 = scmp.lt.s32.totalorder %s18, 1
        %s223 = scalar_select %p222, %s18, 1
        %p224 = scmp.lt.s32.totalorder %s221, 15
        %s225 = scalar_select %p224, %s221, 15
        %s226 = smul.addr %s225, 2
        %s227 = smul.addr %s223, 32
        %s228 = sadd.s32 %s226, %s227
        %s229 = smul.addr %s228, 8
        %s230 = scalar_lea.vmem %s0, %s229
        %s231 = smul.u32 16, %s19
      $region28: #{tpu_custom_call.1} parent=23 // pred_fallthru
        _
      // Predicated region
      $region29: #{tpu_custom_call.1} parent=23 // pred_check
        %p232 = pneg %p81
      $region30: #{tpu_custom_call.1} parent=23 // pred_check_branch
        %234 = sbr.rel (%p232) target = $region32
      $region31: #{tpu_custom_call.1} parent=23 // pred_region
        %s235 = smul.u32 %s19, 16
        %s236 = ssub.s32 %s235, 1
        %p237 = scmp.gt.s32.totalorder %s236, 0
        %s238 = scalar_select %p237, %s236, 0
        %p239 = scmp.lt.s32.totalorder %s18, 1
        %s240 = scalar_select %p239, %s18, 1
        %p241 = scmp.lt.s32.totalorder %s238, 15
        %s242 = scalar_select %p241, %s238, 15
        %s243 = smul.addr %s242, 2
        %s244 = smul.addr %s240, 32
        %s245 = sadd.s32 %s243, %s244
        %s246 = smul.addr %s245, 8
        %s247 = scalar_lea.vmem %s1, %s246
        %s248 = smul.u32 %s19, 16
        %s249 = ssub.s32 %s248, 1
        %p250 = scmp.gt.s32.totalorder %s249, 0
        %s251 = scalar_select %p250, %s249, 0
      $region32: #{tpu_custom_call.1} parent=23 // pred_fallthru
        _
      // Predicated region
      $region33: #{tpu_custom_call.1} parent=23 // pred_check
        %p252 = pneg %p117
      $region34: #{tpu_custom_call.1} parent=23 // pred_check_branch
        %254 = sbr.rel (%p252) target = $region36
      $region35: #{tpu_custom_call.1} parent=23 // pred_region
        %s255 = sadd.s32 %s19, 1
        %s256 = smul.u32 %s255, 16
        %p257 = scmp.lt.s32.totalorder %s256, 15
        %s258 = scalar_select %p257, %s256, 15
        %p259 = scmp.lt.s32.totalorder %s18, 1
        %s260 = scalar_select %p259, %s18, 1
        %p261 = scmp.lt.s32.totalorder %s258, 15
        %s262 = scalar_select %p261, %s258, 15
        %s263 = smul.addr %s262, 2
        %s264 = smul.addr %s260, 32
        %s265 = sadd.s32 %s263, %s264
        %s266 = smul.addr %s265, 8
        %s267 = scalar_lea.vmem %s2, %s266
        %s268 = sadd.s32 %s19, 1
        %s269 = smul.u32 %s268, 16
        %p270 = scmp.lt.s32.totalorder %s269, 15
        %s271 = scalar_select %p270, %s269, 15
      $region36: #{tpu_custom_call.1} parent=23 // pred_fallthru
        _
    $region24: #{tpu_custom_call.1} parent=5 // pred_fallthru
      _
    %p272 = scmp.le.s32.totalorder 1, %s11
    %p273 = scmp.lt.s32.totalorder %s11, 3
    %p274 = pnand %p272, %p273
    %p275 = pneg %p274
    // Predicated region
    $region37: #{tpu_custom_call.1} parent=5 // pred_check
      _
    $region38: #{tpu_custom_call.1} parent=5 // pred_check_branch
      %277 = sbr.rel (%p274) target = $region40
    $region39: #{tpu_custom_call.1} parent=5 // pred_region
      %s278 = ssub.s32 %s11, 1
      %s279 = smul.u32 16, %s21
      %p280 = scmp.lt.s32.totalorder %s20, 1
      %s281 = scalar_select %p280, %s20, 1
      %p282 = scmp.lt.s32.totalorder %s279, 15
      %s283 = scalar_select %p282, %s279, 15
      %s284 = smul.addr %s283, 2
      %s285 = smul.addr %s281, 32
      %s286 = sadd.s32 %s284, %s285
      %s287 = smul.addr %s286, 8
      %s288 = scalar_lea.vmem %s0, %s287
      %p289 = pneg %p51
      %p290 = pneg %p48
      %s291 = smul.u32 %s21, 16
      %s292 = ssub.s32 %s291, 1
      %p293 = scmp.gt.s32.totalorder %s292, 0
      %s294 = scalar_select %p293, %s292, 0
      %p295 = scmp.lt.s32.totalorder %s20, 1
      %s296 = scalar_select %p295, %s20, 1
      %p297 = scmp.lt.s32.totalorder %s294, 15
      %s298 = scalar_select %p297, %s294, 15
      %s299 = smul.addr %s298, 2
      %s300 = smul.addr %s296, 32
      %s301 = sadd.s32 %s299, %s300
      %s302 = smul.addr %s301, 8
      %s303 = scalar_lea.vmem %s1, %s302
      %p304 = pneg %p87
      %p305 = pneg %p84
      %s306 = sadd.s32 %s21, 1
      %s307 = smul.u32 %s306, 16
      %p308 = scmp.lt.s32.totalorder %s307, 15
      %s309 = scalar_select %p308, %s307, 15
      %p310 = scmp.lt.s32.totalorder %s20, 1
      %s311 = scalar_select %p310, %s20, 1
      %p312 = scmp.lt.s32.totalorder %s309, 15
      %s313 = scalar_select %p312, %s309, 15
      %s314 = smul.addr %s313, 2
      %s315 = smul.addr %s311, 32
      %s316 = sadd.s32 %s314, %s315
      %s317 = smul.addr %s316, 8
      %s318 = scalar_lea.vmem %s2, %s317
      %p319 = pneg %p123
      %p320 = pneg %p120
      %p321 = pneg %p144
      %p322 = pneg %p141
      %p323 = pneg %p165
      %p324 = pneg %p162
      %p325 = pneg %p193
      %p326 = pneg %p190
      %s327 = smul.u32 16, %s21
      %p328 = scmp.lt.s32.totalorder %s20, 1
      %s329 = scalar_select %p328, %s20, 1
      %p330 = scmp.lt.s32.totalorder %s327, 15
      %s331 = scalar_select %p330, %s327, 15
      %s332 = smul.addr %s331, 2
      %s333 = smul.addr %s329, 32
      %s334 = sadd.s32 %s332, %s333
      %s335 = smul.addr %s334, 8
      %s336 = scalar_lea.vmem %s5, %s335
      %s337 = smul.u32 16, %s21
      %p338 = scmp.lt.s32.totalorder %s20, 1
      %s339 = scalar_select %p338, %s20, 1
      %p340 = scmp.lt.s32.totalorder %s337, 15
      %s341 = scalar_select %p340, %s337, 15
      %s342 = smul.addr %s341, 2
      %s343 = smul.addr %s339, 32
      %s344 = sadd.s32 %s342, %s343
      %s345 = smul.addr %s344, 8
      %s346 = scalar_lea.vmem %s0, %s345
      %s347 = smul.u32 16, %s21
      %s348 = smul.u32 %s21, 16
      %s349 = ssub.s32 %s348, 1
      %p350 = scmp.gt.s32.totalorder %s349, 0
      %s351 = scalar_select %p350, %s349, 0
      %p352 = scmp.lt.s32.totalorder %s20, 1
      %s353 = scalar_select %p352, %s20, 1
      %p354 = scmp.lt.s32.totalorder %s351, 15
      %s355 = scalar_select %p354, %s351, 15
      %s356 = smul.addr %s355, 2
      %s357 = smul.addr %s353, 32
      %s358 = sadd.s32 %s356, %s357
      %s359 = smul.addr %s358, 8
      %s360 = scalar_lea.vmem %s1, %s359
      %s361 = smul.u32 %s21, 16
      %s362 = ssub.s32 %s361, 1
      %p363 = scmp.gt.s32.totalorder %s362, 0
      %s364 = scalar_select %p363, %s362, 0
      %s365 = sadd.s32 %s21, 1
      %s366 = smul.u32 %s365, 16
      %p367 = scmp.lt.s32.totalorder %s366, 15
      %s368 = scalar_select %p367, %s366, 15
      %p369 = scmp.lt.s32.totalorder %s20, 1
      %s370 = scalar_select %p369, %s20, 1
      %p371 = scmp.lt.s32.totalorder %s368, 15
      %s372 = scalar_select %p371, %s368, 15
      %s373 = smul.addr %s372, 2
      %s374 = smul.addr %s370, 32
      %s375 = sadd.s32 %s373, %s374
      %s376 = smul.addr %s375, 8
      %s377 = scalar_lea.vmem %s2, %s376
      %s378 = sadd.s32 %s21, 1
      %s379 = smul.u32 %s378, 16
      %p380 = scmp.lt.s32.totalorder %s379, 15
      %s381 = scalar_select %p380, %s379, 15
      %s382 = smul.u32 16, %s21
      %p383 = scmp.lt.s32.totalorder %s20, 1
      %s384 = scalar_select %p383, %s20, 1
      %p385 = scmp.lt.s32.totalorder %s382, 15
      %s386 = scalar_select %p385, %s382, 15
      %s387 = smul.addr %s386, 2
      %s388 = smul.addr %s384, 32
      %s389 = sadd.s32 %s387, %s388
      %s390 = smul.addr %s389, 8
      %s391 = scalar_lea.vmem %s5, %s390
      %s392 = smul.u32 16, %s21
      %vm393 = vcmask 24576
      %394 = vst.msk [vmem:[#allocation2] sm:$0x1] %vm393, 0.0
      %395 = vst.msk [vmem:[#allocation2 + $0x18] sm:$0x1] %vm393, 0.0
      %396 = vst.msk [vmem:[#allocation2 + $0x30] sm:$0x1] %vm393, 0.0
      %397 = vst.msk [vmem:[#allocation2 + $0x48] sm:$0x1] %vm393, 0.0
      %398 = vst.msk [vmem:[#allocation2 + $0x60] sm:$0x1] %vm393, 0.0
      %399 = vst.msk [vmem:[#allocation2 + $0x78] sm:$0x1] %vm393, 0.0
      %400 = vst.msk [vmem:[#allocation2 + $0x90] sm:$0x1] %vm393, 0.0
      %401 = vst.msk [vmem:[#allocation2 + $0xa8] sm:$0x1] %vm393, 0.0
      %402 = vst.msk [vmem:[#allocation2 + $0xc0] sm:$0x1] %vm393, 0.0
      %403 = vst.msk [vmem:[#allocation2 + $0xd8] sm:$0x1] %vm393, 0.0
      %404 = vst.msk [vmem:[#allocation2 + $0xf0] sm:$0x1] %vm393, 0.0
      %405 = vst.msk [vmem:[#allocation2 + $0x108] sm:$0x1] %vm393, 0.0
      %406 = vst.msk [vmem:[#allocation2 + $0x120] sm:$0x1] %vm393, 0.0
      %407 = vst.msk [vmem:[#allocation2 + $0x138] sm:$0x1] %vm393, 0.0
      %408 = vst.msk [vmem:[#allocation2 + $0x150] sm:$0x1] %vm393, 0.0
      %409 = vst.msk [vmem:[#allocation2 + $0x168] sm:$0x1] %vm393, 0.0
      %410 = vst.msk [vmem:[#allocation2 + $0x180] sm:$0x1] %vm393, 0.0
      %411 = vst.msk [vmem:[#allocation2 + $0x198] sm:$0x1] %vm393, 0.0
      %412 = vst.msk [vmem:[#allocation2 + $0x11] sm:$0x1] %vm393, 0.0
      %413 = vst.msk [vmem:[#allocation2 + $0x29] sm:$0x1] %vm393, 0.0
      %414 = vst.msk [vmem:[#allocation2 + $0x41] sm:$0x1] %vm393, 0.0
      %415 = vst.msk [vmem:[#allocation2 + $0x59] sm:$0x1] %vm393, 0.0
      %416 = vst.msk [vmem:[#allocation2 + $0x71] sm:$0x1] %vm393, 0.0
      %417 = vst.msk [vmem:[#allocation2 + $0x89] sm:$0x1] %vm393, 0.0
      %418 = vst.msk [vmem:[#allocation2 + $0xa1] sm:$0x1] %vm393, 0.0
      %419 = vst.msk [vmem:[#allocation2 + $0xb9] sm:$0x1] %vm393, 0.0
      %420 = vst.msk [vmem:[#allocation2 + $0xd1] sm:$0x1] %vm393, 0.0
      %421 = vst.msk [vmem:[#allocation2 + $0xe9] sm:$0x1] %vm393, 0.0
      %422 = vst.msk [vmem:[#allocation2 + $0x101] sm:$0x1] %vm393, 0.0
      %423 = vst.msk [vmem:[#allocation2 + $0x119] sm:$0x1] %vm393, 0.0
      %424 = vst.msk [vmem:[#allocation2 + $0x131] sm:$0x1] %vm393, 0.0
      %425 = vst.msk [vmem:[#allocation2 + $0x149] sm:$0x1] %vm393, 0.0
      %426 = vst.msk [vmem:[#allocation2 + $0x161] sm:$0x1] %vm393, 0.0
      %427 = vst.msk [vmem:[#allocation2 + $0x179] sm:$0x1] %vm393, 0.0
      %428 = vst.msk [vmem:[#allocation2 + $0x191] sm:$0x1] %vm393, 0.0
      %429 = vst.msk [vmem:[#allocation2 + $0x1a9] sm:$0x1] %vm393, 0.0
      %v430 = vld [vmem:[%s346] sm:$0xff]
      %v431 = vld [vmem:[%s346 + $0x8] sm:$0xff]
      %v432 = vld [vmem:[%s346 + $0x10] sm:$0xff]
      %v433 = vld [vmem:[%s346 + $0x18] sm:$0xff]
      %v434 = vld [vmem:[%s346 + $0x20] sm:$0xff]
      %v435 = vld [vmem:[%s346 + $0x28] sm:$0xff]
      %v436 = vld [vmem:[%s346 + $0x30] sm:$0xff]
      %v437 = vld [vmem:[%s346 + $0x38] sm:$0xff]
      %v438 = vld [vmem:[%s346 + $0x40] sm:$0xff]
      %v439 = vld [vmem:[%s346 + $0x48] sm:$0xff]
      %v440 = vld [vmem:[%s346 + $0x50] sm:$0xff]
      %v441 = vld [vmem:[%s346 + $0x58] sm:$0xff]
      %v442 = vld [vmem:[%s346 + $0x60] sm:$0xff]
      %v443 = vld [vmem:[%s346 + $0x68] sm:$0xff]
      %v444 = vld [vmem:[%s346 + $0x70] sm:$0xff]
      %v445 = vld [vmem:[%s346 + $0x78] sm:$0xff]
      %v446 = vld [vmem:[%s346 + $0x80] sm:$0xff]
      %v447 = vld [vmem:[%s346 + $0x88] sm:$0xff]
      %v448 = vld [vmem:[%s346 + $0x90] sm:$0xff]
      %v449 = vld [vmem:[%s346 + $0x98] sm:$0xff]
      %v450 = vld [vmem:[%s346 + $0xa0] sm:$0xff]
      %v451 = vld [vmem:[%s346 + $0xa8] sm:$0xff]
      %v452 = vld [vmem:[%s346 + $0xb0] sm:$0xff]
      %v453 = vld [vmem:[%s346 + $0xb8] sm:$0xff]
      %v454 = vld [vmem:[%s346 + $0xc0] sm:$0xff]
      %v455 = vld [vmem:[%s346 + $0xc8] sm:$0xff]
      %v456 = vld [vmem:[%s346 + $0xd0] sm:$0xff]
      %v457 = vld [vmem:[%s346 + $0xd8] sm:$0xff]
      %v458 = vld [vmem:[%s346 + $0xe0] sm:$0xff]
      %v459 = vld [vmem:[%s346 + $0xe8] sm:$0xff]
      %v460 = vld [vmem:[%s346 + $0xf0] sm:$0xff]
      %v461 = vld [vmem:[%s346 + $0xf8] sm:$0xff]
      %s462 = scalar_lea.vmem [#allocation2], 24
      %vm463 = vcmask 31744
      %464 = vst.msk [vmem:[%s462 + $0x1] sm:$0xff] %vm463, %v430
      %465 = vst.msk [vmem:[%s462 + $0x9] sm:$0xff] %vm463, %v431
      %466 = vst.msk [vmem:[%s462 + $0x19] sm:$0xff] %vm463, %v432
      %467 = vst.msk [vmem:[%s462 + $0x21] sm:$0xff] %vm463, %v433
      %468 = vst.msk [vmem:[%s462 + $0x31] sm:$0xff] %vm463, %v434
      %469 = vst.msk [vmem:[%s462 + $0x39] sm:$0xff] %vm463, %v435
      %470 = vst.msk [vmem:[%s462 + $0x49] sm:$0xff] %vm463, %v436
      %471 = vst.msk [vmem:[%s462 + $0x51] sm:$0xff] %vm463, %v437
      %472 = vst.msk [vmem:[%s462 + $0x61] sm:$0xff] %vm463, %v438
      %473 = vst.msk [vmem:[%s462 + $0x69] sm:$0xff] %vm463, %v439
      %474 = vst.msk [vmem:[%s462 + $0x79] sm:$0xff] %vm463, %v440
      %475 = vst.msk [vmem:[%s462 + $0x81] sm:$0xff] %vm463, %v441
      %476 = vst.msk [vmem:[%s462 + $0x91] sm:$0xff] %vm463, %v442
      %477 = vst.msk [vmem:[%s462 + $0x99] sm:$0xff] %vm463, %v443
      %478 = vst.msk [vmem:[%s462 + $0xa9] sm:$0xff] %vm463, %v444
      %479 = vst.msk [vmem:[%s462 + $0xb1] sm:$0xff] %vm463, %v445
      %480 = vst.msk [vmem:[%s462 + $0xc1] sm:$0xff] %vm463, %v446
      %481 = vst.msk [vmem:[%s462 + $0xc9] sm:$0xff] %vm463, %v447
      %482 = vst.msk [vmem:[%s462 + $0xd9] sm:$0xff] %vm463, %v448
      %483 = vst.msk [vmem:[%s462 + $0xe1] sm:$0xff] %vm463, %v449
      %484 = vst.msk [vmem:[%s462 + $0xf1] sm:$0xff] %vm463, %v450
      %485 = vst.msk [vmem:[%s462 + $0xf9] sm:$0xff] %vm463, %v451
      %486 = vst.msk [vmem:[%s462 + $0x109] sm:$0xff] %vm463, %v452
      %487 = vst.msk [vmem:[%s462 + $0x111] sm:$0xff] %vm463, %v453
      %488 = vst.msk [vmem:[%s462 + $0x121] sm:$0xff] %vm463, %v454
      %489 = vst.msk [vmem:[%s462 + $0x129] sm:$0xff] %vm463, %v455
      %490 = vst.msk [vmem:[%s462 + $0x139] sm:$0xff] %vm463, %v456
      %491 = vst.msk [vmem:[%s462 + $0x141] sm:$0xff] %vm463, %v457
      %492 = vst.msk [vmem:[%s462 + $0x151] sm:$0xff] %vm463, %v458
      %493 = vst.msk [vmem:[%s462 + $0x159] sm:$0xff] %vm463, %v459
      %494 = vst.msk [vmem:[%s462 + $0x169] sm:$0xff] %vm463, %v460
      %495 = vst.msk [vmem:[%s462 + $0x171] sm:$0xff] %vm463, %v461
      %p496 = scmp.gt.s32.totalorder %s21, 0
      // Predicated region
      $region41: #{tpu_custom_call.1} parent=39 // pred_check
        %p497 = pneg %p496
      $region42: #{tpu_custom_call.1} parent=39 // pred_check_branch
        %499 = sbr.rel (%p497) target = $region44
      $region43: #{tpu_custom_call.1} parent=39 // pred_region
        %v500 = vld [vmem:[%s360] sm:$0xff]
        %v501 = vld [vmem:[%s360 + $0x8] sm:$0xff]
        %502 = vst.msk [vmem:[#allocation2 + $0x1] sm:$0xff] %vm463, %v500
        %503 = vst.msk [vmem:[#allocation2 + $0x9] sm:$0xff] %vm463, %v501
      $region44: #{tpu_custom_call.1} parent=39 // pred_fallthru
        _
      %p504 = scmp.eq.s32.totalorder %s21, 0
      // Predicated region
      $region45: #{tpu_custom_call.1} parent=39 // pred_check
        %p505 = pneg %p504
      $region46: #{tpu_custom_call.1} parent=39 // pred_check_branch
        %507 = sbr.rel (%p505) target = $region48
      $region47: #{tpu_custom_call.1} parent=39 // pred_region
        %508 = vst.msk [vmem:[#allocation2 + $0x1] sm:$0xff] %vm463, 0.0
        %509 = vst.msk [vmem:[#allocation2 + $0x9] sm:$0xff] %vm463, 0.0
      $region48: #{tpu_custom_call.1} parent=39 // pred_fallthru
        _
      %p510 = scmp.lt.s32.totalorder %s21, 0
      // Predicated region
      $region49: #{tpu_custom_call.1} parent=39 // pred_check
        %p511 = pneg %p510
      $region50: #{tpu_custom_call.1} parent=39 // pred_check_branch
        %513 = sbr.rel (%p511) target = $region52
      $region51: #{tpu_custom_call.1} parent=39 // pred_region
        %v514 = vld [vmem:[%s377] sm:$0xff]
        %v515 = vld [vmem:[%s377 + $0x8] sm:$0xff]
        %s516 = scalar_lea.vmem [#allocation2], 408
        %517 = vst.msk [vmem:[%s516 + $0x1] sm:$0xff] %vm463, %v514
        %518 = vst.msk [vmem:[%s516 + $0x9] sm:$0xff] %vm463, %v515
      $region52: #{tpu_custom_call.1} parent=39 // pred_fallthru
        _
      // Predicated region
      $region53: #{tpu_custom_call.1} parent=39 // pred_check
        %p519 = pneg %p504
      $region54: #{tpu_custom_call.1} parent=39 // pred_check_branch
        %521 = sbr.rel (%p519) target = $region56
      $region55: #{tpu_custom_call.1} parent=39 // pred_region
        %s522 = scalar_lea.vmem [#allocation2], 408
        %523 = vst.msk [vmem:[%s522 + $0x1] sm:$0xff] %vm463, 0.0
        %524 = vst.msk [vmem:[%s522 + $0x9] sm:$0xff] %vm463, 0.0
      $region56: #{tpu_custom_call.1} parent=39 // pred_fallthru
        _
      %v525 = vld [vmem:[#allocation2] sm:$0xff]
      %v526 = vld [vmem:[#allocation2 + $0x8] sm:$0xff]
      %v527 = vld [vmem:[#allocation2 + $0x18] sm:$0xff]
      %v528 = vld [vmem:[#allocation2 + $0x20] sm:$0xff]
      %v529 = vld [vmem:[#allocation2 + $0x30] sm:$0xff]
      %v530 = vld [vmem:[#allocation2 + $0x38] sm:$0xff]
      %v531 = vld [vmem:[#allocation2 + $0x48] sm:$0xff]
      %v532 = vld [vmem:[#allocation2 + $0x50] sm:$0xff]
      %v533 = vld [vmem:[#allocation2 + $0x60] sm:$0xff]
      %v534 = vld [vmem:[#allocation2 + $0x68] sm:$0xff]
      %v535 = vld [vmem:[#allocation2 + $0x78] sm:$0xff]
      %v536 = vld [vmem:[#allocation2 + $0x80] sm:$0xff]
      %v537 = vld [vmem:[#allocation2 + $0x90] sm:$0xff]
      %v538 = vld [vmem:[#allocation2 + $0x98] sm:$0xff]
      %v539 = vld [vmem:[#allocation2 + $0xa8] sm:$0xff]
      %v540 = vld [vmem:[#allocation2 + $0xb0] sm:$0xff]
      %v541 = vld [vmem:[#allocation2 + $0xc0] sm:$0xff]
      %v542 = vld [vmem:[#allocation2 + $0xc8] sm:$0xff]
      %v543 = vld [vmem:[#allocation2 + $0xd8] sm:$0xff]
      %v544 = vld [vmem:[#allocation2 + $0xe0] sm:$0xff]
      %v545 = vld [vmem:[#allocation2 + $0xf0] sm:$0xff]
      %v546 = vld [vmem:[#allocation2 + $0xf8] sm:$0xff]
      %v547 = vld [vmem:[#allocation2 + $0x108] sm:$0xff]
      %v548 = vld [vmem:[#allocation2 + $0x110] sm:$0xff]
      %v549 = vld [vmem:[#allocation2 + $0x120] sm:$0xff]
      %v550 = vld [vmem:[#allocation2 + $0x128] sm:$0xff]
      %v551 = vld [vmem:[#allocation2 + $0x138] sm:$0xff]
      %v552 = vld [vmem:[#allocation2 + $0x140] sm:$0xff]
      %v553 = vld [vmem:[#allocation2 + $0x150] sm:$0xff]
      %v554 = vld [vmem:[#allocation2 + $0x158] sm:$0xff]
      %v555 = vld [vmem:[#allocation2 + $0x168] sm:$0xff]
      %v556 = vld [vmem:[#allocation2 + $0x170] sm:$0xff]
      %v557 = vld [vmem:[#allocation2 + $0x1] sm:$0xff]
      %v558 = vld [vmem:[#allocation2 + $0x9] sm:$0xff]
      %v559 = vld [vmem:[#allocation2 + $0x19] sm:$0xff]
      %v560 = vld [vmem:[#allocation2 + $0x21] sm:$0xff]
      %v561 = vld [vmem:[#allocation2 + $0x31] sm:$0xff]
      %v562 = vld [vmem:[#allocation2 + $0x39] sm:$0xff]
      %v563 = vld [vmem:[#allocation2 + $0x49] sm:$0xff]
      %v564 = vld [vmem:[#allocation2 + $0x51] sm:$0xff]
      %v565 = vld [vmem:[#allocation2 + $0x61] sm:$0xff]
      %v566 = vld [vmem:[#allocation2 + $0x69] sm:$0xff]
      %v567 = vld [vmem:[#allocation2 + $0x79] sm:$0xff]
      %v568 = vld [vmem:[#allocation2 + $0x81] sm:$0xff]
      %v569 = vld [vmem:[#allocation2 + $0x91] sm:$0xff]
      %v570 = vld [vmem:[#allocation2 + $0x99] sm:$0xff]
      %v571 = vld [vmem:[#allocation2 + $0xa9] sm:$0xff]
      %v572 = vld [vmem:[#allocation2 + $0xb1] sm:$0xff]
      %v573 = vld [vmem:[#allocation2 + $0xc1] sm:$0xff]
      %v574 = vld [vmem:[#allocation2 + $0xc9] sm:$0xff]
      %v575 = vld [vmem:[#allocation2 + $0xd9] sm:$0xff]
      %v576 = vld [vmem:[#allocation2 + $0xe1] sm:$0xff]
      %v577 = vld [vmem:[#allocation2 + $0xf1] sm:$0xff]
      %v578 = vld [vmem:[#allocation2 + $0xf9] sm:$0xff]
      %v579 = vld [vmem:[#allocation2 + $0x109] sm:$0xff]
      %v580 = vld [vmem:[#allocation2 + $0x111] sm:$0xff]
      %v581 = vld [vmem:[#allocation2 + $0x121] sm:$0xff]
      %v582 = vld [vmem:[#allocation2 + $0x129] sm:$0xff]
      %v583 = vld [vmem:[#allocation2 + $0x139] sm:$0xff]
      %v584 = vld [vmem:[#allocation2 + $0x141] sm:$0xff]
      %v585 = vld [vmem:[#allocation2 + $0x151] sm:$0xff]
      %v586 = vld [vmem:[#allocation2 + $0x159] sm:$0xff]
      %v587 = vld [vmem:[#allocation2 + $0x169] sm:$0xff]
      %v588 = vld [vmem:[#allocation2 + $0x171] sm:$0xff]
      %v589 = vld [vmem:[#allocation2 + $0x2] sm:$0xff]
      %v590 = vld [vmem:[#allocation2 + $0xa] sm:$0xff]
      %v591 = vld [vmem:[#allocation2 + $0x1a] sm:$0xff]
      %v592 = vld [vmem:[#allocation2 + $0x22] sm:$0xff]
      %v593 = vld [vmem:[#allocation2 + $0x32] sm:$0xff]
      %v594 = vld [vmem:[#allocation2 + $0x3a] sm:$0xff]
      %v595 = vld [vmem:[#allocation2 + $0x4a] sm:$0xff]
      %v596 = vld [vmem:[#allocation2 + $0x52] sm:$0xff]
      %v597 = vld [vmem:[#allocation2 + $0x62] sm:$0xff]
      %v598 = vld [vmem:[#allocation2 + $0x6a] sm:$0xff]
      %v599 = vld [vmem:[#allocation2 + $0x7a] sm:$0xff]
      %v600 = vld [vmem:[#allocation2 + $0x82] sm:$0xff]
      %v601 = vld [vmem:[#allocation2 + $0x92] sm:$0xff]
      %v602 = vld [vmem:[#allocation2 + $0x9a] sm:$0xff]
      %v603 = vld [vmem:[#allocation2 + $0xaa] sm:$0xff]
      %v604 = vld [vmem:[#allocation2 + $0xb2] sm:$0xff]
      %v605 = vld [vmem:[#allocation2 + $0xc2] sm:$0xff]
      %v606 = vld [vmem:[#allocation2 + $0xca] sm:$0xff]
      %v607 = vld [vmem:[#allocation2 + $0xda] sm:$0xff]
      %v608 = vld [vmem:[#allocation2 + $0xe2] sm:$0xff]
      %v609 = vld [vmem:[#allocation2 + $0xf2] sm:$0xff]
      %v610 = vld [vmem:[#allocation2 + $0xfa] sm:$0xff]
      %v611 = vld [vmem:[#allocation2 + $0x10a] sm:$0xff]
      %v612 = vld [vmem:[#allocation2 + $0x112] sm:$0xff]
      %v613 = vld [vmem:[#allocation2 + $0x122] sm:$0xff]
      %v614 = vld [vmem:[#allocation2 + $0x12a] sm:$0xff]
      %v615 = vld [vmem:[#allocation2 + $0x13a] sm:$0xff]
      %v616 = vld [vmem:[#allocation2 + $0x142] sm:$0xff]
      %v617 = vld [vmem:[#allocation2 + $0x152] sm:$0xff]
      %v618 = vld [vmem:[#allocation2 + $0x15a] sm:$0xff]
      %v619 = vld [vmem:[#allocation2 + $0x16a] sm:$0xff]
      %v620 = vld [vmem:[#allocation2 + $0x172] sm:$0xff]
      %v621 = vld [vmem:[%s462] sm:$0xff]
      %v622 = vld [vmem:[%s462 + $0x8] sm:$0xff]
      %v623 = vld [vmem:[%s462 + $0x18] sm:$0xff]
      %v624 = vld [vmem:[%s462 + $0x20] sm:$0xff]
      %v625 = vld [vmem:[%s462 + $0x30] sm:$0xff]
      %v626 = vld [vmem:[%s462 + $0x38] sm:$0xff]
      %v627 = vld [vmem:[%s462 + $0x48] sm:$0xff]
      %v628 = vld [vmem:[%s462 + $0x50] sm:$0xff]
      %v629 = vld [vmem:[%s462 + $0x60] sm:$0xff]
      %v630 = vld [vmem:[%s462 + $0x68] sm:$0xff]
      %v631 = vld [vmem:[%s462 + $0x78] sm:$0xff]
      %v632 = vld [vmem:[%s462 + $0x80] sm:$0xff]
      %v633 = vld [vmem:[%s462 + $0x90] sm:$0xff]
      %v634 = vld [vmem:[%s462 + $0x98] sm:$0xff]
      %v635 = vld [vmem:[%s462 + $0xa8] sm:$0xff]
      %v636 = vld [vmem:[%s462 + $0xb0] sm:$0xff]
      %v637 = vld [vmem:[%s462 + $0xc0] sm:$0xff]
      %v638 = vld [vmem:[%s462 + $0xc8] sm:$0xff]
      %v639 = vld [vmem:[%s462 + $0xd8] sm:$0xff]
      %v640 = vld [vmem:[%s462 + $0xe0] sm:$0xff]
      %v641 = vld [vmem:[%s462 + $0xf0] sm:$0xff]
      %v642 = vld [vmem:[%s462 + $0xf8] sm:$0xff]
      %v643 = vld [vmem:[%s462 + $0x108] sm:$0xff]
      %v644 = vld [vmem:[%s462 + $0x110] sm:$0xff]
      %v645 = vld [vmem:[%s462 + $0x120] sm:$0xff]
      %v646 = vld [vmem:[%s462 + $0x128] sm:$0xff]
      %v647 = vld [vmem:[%s462 + $0x138] sm:$0xff]
      %v648 = vld [vmem:[%s462 + $0x140] sm:$0xff]
      %v649 = vld [vmem:[%s462 + $0x150] sm:$0xff]
      %v650 = vld [vmem:[%s462 + $0x158] sm:$0xff]
      %v651 = vld [vmem:[%s462 + $0x168] sm:$0xff]
      %v652 = vld [vmem:[%s462 + $0x170] sm:$0xff]
      %v653 = vld [vmem:[%s462 + $0x1] sm:$0xff]
      %v654 = vld [vmem:[%s462 + $0x9] sm:$0xff]
      %v655 = vld [vmem:[%s462 + $0x19] sm:$0xff]
      %v656 = vld [vmem:[%s462 + $0x21] sm:$0xff]
      %v657 = vld [vmem:[%s462 + $0x31] sm:$0xff]
      %v658 = vld [vmem:[%s462 + $0x39] sm:$0xff]
      %v659 = vld [vmem:[%s462 + $0x49] sm:$0xff]
      %v660 = vld [vmem:[%s462 + $0x51] sm:$0xff]
      %v661 = vld [vmem:[%s462 + $0x61] sm:$0xff]
      %v662 = vld [vmem:[%s462 + $0x69] sm:$0xff]
      %v663 = vld [vmem:[%s462 + $0x79] sm:$0xff]
      %v664 = vld [vmem:[%s462 + $0x81] sm:$0xff]
      %v665 = vld [vmem:[%s462 + $0x91] sm:$0xff]
      %v666 = vld [vmem:[%s462 + $0x99] sm:$0xff]
      %v667 = vld [vmem:[%s462 + $0xa9] sm:$0xff]
      %v668 = vld [vmem:[%s462 + $0xb1] sm:$0xff]
      %v669 = vld [vmem:[%s462 + $0xc1] sm:$0xff]
      %v670 = vld [vmem:[%s462 + $0xc9] sm:$0xff]
      %v671 = vld [vmem:[%s462 + $0xd9] sm:$0xff]
      %v672 = vld [vmem:[%s462 + $0xe1] sm:$0xff]
      %v673 = vld [vmem:[%s462 + $0xf1] sm:$0xff]
      %v674 = vld [vmem:[%s462 + $0xf9] sm:$0xff]
      %v675 = vld [vmem:[%s462 + $0x109] sm:$0xff]
      %v676 = vld [vmem:[%s462 + $0x111] sm:$0xff]
      %v677 = vld [vmem:[%s462 + $0x121] sm:$0xff]
      %v678 = vld [vmem:[%s462 + $0x129] sm:$0xff]
      %v679 = vld [vmem:[%s462 + $0x139] sm:$0xff]
      %v680 = vld [vmem:[%s462 + $0x141] sm:$0xff]
      %v681 = vld [vmem:[%s462 + $0x151] sm:$0xff]
      %v682 = vld [vmem:[%s462 + $0x159] sm:$0xff]
      %v683 = vld [vmem:[%s462 + $0x169] sm:$0xff]
      %v684 = vld [vmem:[%s462 + $0x171] sm:$0xff]
      %v685 = vld [vmem:[%s462 + $0x2] sm:$0xff]
      %v686 = vld [vmem:[%s462 + $0xa] sm:$0xff]
      %v687 = vld [vmem:[%s462 + $0x1a] sm:$0xff]
      %v688 = vld [vmem:[%s462 + $0x22] sm:$0xff]
      %v689 = vld [vmem:[%s462 + $0x32] sm:$0xff]
      %v690 = vld [vmem:[%s462 + $0x3a] sm:$0xff]
      %v691 = vld [vmem:[%s462 + $0x4a] sm:$0xff]
      %v692 = vld [vmem:[%s462 + $0x52] sm:$0xff]
      %v693 = vld [vmem:[%s462 + $0x62] sm:$0xff]
      %v694 = vld [vmem:[%s462 + $0x6a] sm:$0xff]
      %v695 = vld [vmem:[%s462 + $0x7a] sm:$0xff]
      %v696 = vld [vmem:[%s462 + $0x82] sm:$0xff]
      %v697 = vld [vmem:[%s462 + $0x92] sm:$0xff]
      %v698 = vld [vmem:[%s462 + $0x9a] sm:$0xff]
      %v699 = vld [vmem:[%s462 + $0xaa] sm:$0xff]
      %v700 = vld [vmem:[%s462 + $0xb2] sm:$0xff]
      %v701 = vld [vmem:[%s462 + $0xc2] sm:$0xff]
      %v702 = vld [vmem:[%s462 + $0xca] sm:$0xff]
      %v703 = vld [vmem:[%s462 + $0xda] sm:$0xff]
      %v704 = vld [vmem:[%s462 + $0xe2] sm:$0xff]
      %v705 = vld [vmem:[%s462 + $0xf2] sm:$0xff]
      %v706 = vld [vmem:[%s462 + $0xfa] sm:$0xff]
      %v707 = vld [vmem:[%s462 + $0x10a] sm:$0xff]
      %v708 = vld [vmem:[%s462 + $0x112] sm:$0xff]
      %v709 = vld [vmem:[%s462 + $0x122] sm:$0xff]
      %v710 = vld [vmem:[%s462 + $0x12a] sm:$0xff]
      %v711 = vld [vmem:[%s462 + $0x13a] sm:$0xff]
      %v712 = vld [vmem:[%s462 + $0x142] sm:$0xff]
      %v713 = vld [vmem:[%s462 + $0x152] sm:$0xff]
      %v714 = vld [vmem:[%s462 + $0x15a] sm:$0xff]
      %v715 = vld [vmem:[%s462 + $0x16a] sm:$0xff]
      %v716 = vld [vmem:[%s462 + $0x172] sm:$0xff]
      %s717 = scalar_lea.vmem [#allocation2], 48
      %v718 = vld [vmem:[%s717] sm:$0xff]
      %v719 = vld [vmem:[%s717 + $0x8] sm:$0xff]
      %v720 = vld [vmem:[%s717 + $0x18] sm:$0xff]
      %v721 = vld [vmem:[%s717 + $0x20] sm:$0xff]
      %v722 = vld [vmem:[%s717 + $0x30] sm:$0xff]
      %v723 = vld [vmem:[%s717 + $0x38] sm:$0xff]
      %v724 = vld [vmem:[%s717 + $0x48] sm:$0xff]
      %v725 = vld [vmem:[%s717 + $0x50] sm:$0xff]
      %v726 = vld [vmem:[%s717 + $0x60] sm:$0xff]
      %v727 = vld [vmem:[%s717 + $0x68] sm:$0xff]
      %v728 = vld [vmem:[%s717 + $0x78] sm:$0xff]
      %v729 = vld [vmem:[%s717 + $0x80] sm:$0xff]
      %v730 = vld [vmem:[%s717 + $0x90] sm:$0xff]
      %v731 = vld [vmem:[%s717 + $0x98] sm:$0xff]
      %v732 = vld [vmem:[%s717 + $0xa8] sm:$0xff]
      %v733 = vld [vmem:[%s717 + $0xb0] sm:$0xff]
      %v734 = vld [vmem:[%s717 + $0xc0] sm:$0xff]
      %v735 = vld [vmem:[%s717 + $0xc8] sm:$0xff]
      %v736 = vld [vmem:[%s717 + $0xd8] sm:$0xff]
      %v737 = vld [vmem:[%s717 + $0xe0] sm:$0xff]
      %v738 = vld [vmem:[%s717 + $0xf0] sm:$0xff]
      %v739 = vld [vmem:[%s717 + $0xf8] sm:$0xff]
      %v740 = vld [vmem:[%s717 + $0x108] sm:$0xff]
      %v741 = vld [vmem:[%s717 + $0x110] sm:$0xff]
      %v742 = vld [vmem:[%s717 + $0x120] sm:$0xff]
      %v743 = vld [vmem:[%s717 + $0x128] sm:$0xff]
      %v744 = vld [vmem:[%s717 + $0x138] sm:$0xff]
      %v745 = vld [vmem:[%s717 + $0x140] sm:$0xff]
      %v746 = vld [vmem:[%s717 + $0x150] sm:$0xff]
      %v747 = vld [vmem:[%s717 + $0x158] sm:$0xff]
      %v748 = vld [vmem:[%s717 + $0x168] sm:$0xff]
      %v749 = vld [vmem:[%s717 + $0x170] sm:$0xff]
      %v750 = vld [vmem:[%s717 + $0x1] sm:$0xff]
      %v751 = vld [vmem:[%s717 + $0x9] sm:$0xff]
      %v752 = vld [vmem:[%s717 + $0x19] sm:$0xff]
      %v753 = vld [vmem:[%s717 + $0x21] sm:$0xff]
      %v754 = vld [vmem:[%s717 + $0x31] sm:$0xff]
      %v755 = vld [vmem:[%s717 + $0x39] sm:$0xff]
      %v756 = vld [vmem:[%s717 + $0x49] sm:$0xff]
      %v757 = vld [vmem:[%s717 + $0x51] sm:$0xff]
      %v758 = vld [vmem:[%s717 + $0x61] sm:$0xff]
      %v759 = vld [vmem:[%s717 + $0x69] sm:$0xff]
      %v760 = vld [vmem:[%s717 + $0x79] sm:$0xff]
      %v761 = vld [vmem:[%s717 + $0x81] sm:$0xff]
      %v762 = vld [vmem:[%s717 + $0x91] sm:$0xff]
      %v763 = vld [vmem:[%s717 + $0x99] sm:$0xff]
      %v764 = vld [vmem:[%s717 + $0xa9] sm:$0xff]
      %v765 = vld [vmem:[%s717 + $0xb1] sm:$0xff]
      %v766 = vld [vmem:[%s717 + $0xc1] sm:$0xff]
      %v767 = vld [vmem:[%s717 + $0xc9] sm:$0xff]
      %v768 = vld [vmem:[%s717 + $0xd9] sm:$0xff]
      %v769 = vld [vmem:[%s717 + $0xe1] sm:$0xff]
      %v770 = vld [vmem:[%s717 + $0xf1] sm:$0xff]
      %v771 = vld [vmem:[%s717 + $0xf9] sm:$0xff]
      %v772 = vld [vmem:[%s717 + $0x109] sm:$0xff]
      %v773 = vld [vmem:[%s717 + $0x111] sm:$0xff]
      %v774 = vld [vmem:[%s717 + $0x121] sm:$0xff]
      %v775 = vld [vmem:[%s717 + $0x129] sm:$0xff]
      %v776 = vld [vmem:[%s717 + $0x139] sm:$0xff]
      %v777 = vld [vmem:[%s717 + $0x141] sm:$0xff]
      %v778 = vld [vmem:[%s717 + $0x151] sm:$0xff]
      %v779 = vld [vmem:[%s717 + $0x159] sm:$0xff]
      %v780 = vld [vmem:[%s717 + $0x169] sm:$0xff]
      %v781 = vld [vmem:[%s717 + $0x171] sm:$0xff]
      %v782 = vld [vmem:[%s717 + $0x2] sm:$0xff]
      %v783 = vld [vmem:[%s717 + $0xa] sm:$0xff]
      %v784 = vld [vmem:[%s717 + $0x1a] sm:$0xff]
      %v785 = vld [vmem:[%s717 + $0x22] sm:$0xff]
      %v786 = vld [vmem:[%s717 + $0x32] sm:$0xff]
      %v787 = vld [vmem:[%s717 + $0x3a] sm:$0xff]
      %v788 = vld [vmem:[%s717 + $0x4a] sm:$0xff]
      %v789 = vld [vmem:[%s717 + $0x52] sm:$0xff]
      %v790 = vld [vmem:[%s717 + $0x62] sm:$0xff]
      %v791 = vld [vmem:[%s717 + $0x6a] sm:$0xff]
      %v792 = vld [vmem:[%s717 + $0x7a] sm:$0xff]
      %v793 = vld [vmem:[%s717 + $0x82] sm:$0xff]
      %v794 = vld [vmem:[%s717 + $0x92] sm:$0xff]
      %v795 = vld [vmem:[%s717 + $0x9a] sm:$0xff]
      %v796 = vld [vmem:[%s717 + $0xaa] sm:$0xff]
      %v797 = vld [vmem:[%s717 + $0xb2] sm:$0xff]
      %v798 = vld [vmem:[%s717 + $0xc2] sm:$0xff]
      %v799 = vld [vmem:[%s717 + $0xca] sm:$0xff]
      %v800 = vld [vmem:[%s717 + $0xda] sm:$0xff]
      %v801 = vld [vmem:[%s717 + $0xe2] sm:$0xff]
      %v802 = vld [vmem:[%s717 + $0xf2] sm:$0xff]
      %v803 = vld [vmem:[%s717 + $0xfa] sm:$0xff]
      %v804 = vld [vmem:[%s717 + $0x10a] sm:$0xff]
      %v805 = vld [vmem:[%s717 + $0x112] sm:$0xff]
      %v806 = vld [vmem:[%s717 + $0x122] sm:$0xff]
      %v807 = vld [vmem:[%s717 + $0x12a] sm:$0xff]
      %v808 = vld [vmem:[%s717 + $0x13a] sm:$0xff]
      %v809 = vld [vmem:[%s717 + $0x142] sm:$0xff]
      %v810 = vld [vmem:[%s717 + $0x152] sm:$0xff]
      %v811 = vld [vmem:[%s717 + $0x15a] sm:$0xff]
      %v812 = vld [vmem:[%s717 + $0x16a] sm:$0xff]
      %v813 = vld [vmem:[%s717 + $0x172] sm:$0xff]
      %846 = vrot.lane.b32.xlu0 %v557, 4
      %v847 = vpop.permute.xlu0 %846
      %848 = vrot.lane.b32.xlu0 %v558, 4
      %v849 = vpop.permute.xlu0 %848
      %850 = vrot.lane.b32.xlu0 %v559, 4
      %v851 = vpop.permute.xlu0 %850
      %852 = vrot.lane.b32.xlu0 %v560, 4
      %v853 = vpop.permute.xlu0 %852
      %854 = vrot.lane.b32.xlu0 %v561, 4
      %v855 = vpop.permute.xlu0 %854
      %856 = vrot.lane.b32.xlu0 %v562, 4
      %v857 = vpop.permute.xlu0 %856
      %858 = vrot.lane.b32.xlu0 %v563, 4
      %v859 = vpop.permute.xlu0 %858
      %860 = vrot.lane.b32.xlu0 %v564, 4
      %v861 = vpop.permute.xlu0 %860
      %862 = vrot.lane.b32.xlu0 %v565, 4
      %v863 = vpop.permute.xlu0 %862
      %864 = vrot.lane.b32.xlu0 %v566, 4
      %v865 = vpop.permute.xlu0 %864
      %866 = vrot.lane.b32.xlu0 %v567, 4
      %v867 = vpop.permute.xlu0 %866
      %868 = vrot.lane.b32.xlu0 %v568, 4
      %v869 = vpop.permute.xlu0 %868
      %870 = vrot.lane.b32.xlu0 %v569, 4
      %v871 = vpop.permute.xlu0 %870
      %872 = vrot.lane.b32.xlu0 %v570, 4
      %v873 = vpop.permute.xlu0 %872
      %874 = vrot.lane.b32.xlu0 %v571, 4
      %v875 = vpop.permute.xlu0 %874
      %876 = vrot.lane.b32.xlu0 %v572, 4
      %v877 = vpop.permute.xlu0 %876
      %878 = vrot.lane.b32.xlu0 %v573, 4
      %v879 = vpop.permute.xlu0 %878
      %880 = vrot.lane.b32.xlu0 %v574, 4
      %v881 = vpop.permute.xlu0 %880
      %882 = vrot.lane.b32.xlu0 %v575, 4
      %v883 = vpop.permute.xlu0 %882
      %884 = vrot.lane.b32.xlu0 %v576, 4
      %v885 = vpop.permute.xlu0 %884
      %886 = vrot.lane.b32.xlu0 %v577, 4
      %v887 = vpop.permute.xlu0 %886
      %888 = vrot.lane.b32.xlu0 %v578, 4
      %v889 = vpop.permute.xlu0 %888
      %890 = vrot.lane.b32.xlu0 %v579, 4
      %v891 = vpop.permute.xlu0 %890
      %892 = vrot.lane.b32.xlu0 %v580, 4
      %v893 = vpop.permute.xlu0 %892
      %894 = vrot.lane.b32.xlu0 %v581, 4
      %v895 = vpop.permute.xlu0 %894
      %896 = vrot.lane.b32.xlu0 %v582, 4
      %v897 = vpop.permute.xlu0 %896
      %898 = vrot.lane.b32.xlu0 %v583, 4
      %v899 = vpop.permute.xlu0 %898
      %900 = vrot.lane.b32.xlu0 %v584, 4
      %v901 = vpop.permute.xlu0 %900
      %902 = vrot.lane.b32.xlu0 %v585, 4
      %v903 = vpop.permute.xlu0 %902
      %904 = vrot.lane.b32.xlu0 %v586, 4
      %v905 = vpop.permute.xlu0 %904
      %906 = vrot.lane.b32.xlu0 %v587, 4
      %v907 = vpop.permute.xlu0 %906
      %908 = vrot.lane.b32.xlu0 %v588, 4
      %v909 = vpop.permute.xlu0 %908
      %974 = vrot.lane.b32.xlu0 %v589, 8
      %v975 = vpop.permute.xlu0 %974
      %976 = vrot.lane.b32.xlu0 %v590, 8
      %v977 = vpop.permute.xlu0 %976
      %978 = vrot.lane.b32.xlu0 %v591, 8
      %v979 = vpop.permute.xlu0 %978
      %980 = vrot.lane.b32.xlu0 %v592, 8
      %v981 = vpop.permute.xlu0 %980
      %982 = vrot.lane.b32.xlu0 %v593, 8
      %v983 = vpop.permute.xlu0 %982
      %984 = vrot.lane.b32.xlu0 %v594, 8
      %v985 = vpop.permute.xlu0 %984
      %986 = vrot.lane.b32.xlu0 %v595, 8
      %v987 = vpop.permute.xlu0 %986
      %988 = vrot.lane.b32.xlu0 %v596, 8
      %v989 = vpop.permute.xlu0 %988
      %990 = vrot.lane.b32.xlu0 %v597, 8
      %v991 = vpop.permute.xlu0 %990
      %992 = vrot.lane.b32.xlu0 %v598, 8
      %v993 = vpop.permute.xlu0 %992
      %994 = vrot.lane.b32.xlu0 %v599, 8
      %v995 = vpop.permute.xlu0 %994
      %996 = vrot.lane.b32.xlu0 %v600, 8
      %v997 = vpop.permute.xlu0 %996
      %998 = vrot.lane.b32.xlu0 %v601, 8
      %v999 = vpop.permute.xlu0 %998
      %1000 = vrot.lane.b32.xlu0 %v602, 8
      %v1001 = vpop.permute.xlu0 %1000
      %1002 = vrot.lane.b32.xlu0 %v603, 8
      %v1003 = vpop.permute.xlu0 %1002
      %1004 = vrot.lane.b32.xlu0 %v604, 8
      %v1005 = vpop.permute.xlu0 %1004
      %1006 = vrot.lane.b32.xlu0 %v605, 8
      %v1007 = vpop.permute.xlu0 %1006
      %1008 = vrot.lane.b32.xlu0 %v606, 8
      %v1009 = vpop.permute.xlu0 %1008
      %1010 = vrot.lane.b32.xlu0 %v607, 8
      %v1011 = vpop.permute.xlu0 %1010
      %1012 = vrot.lane.b32.xlu0 %v608, 8
      %v1013 = vpop.permute.xlu0 %1012
      %1014 = vrot.lane.b32.xlu0 %v609, 8
      %v1015 = vpop.permute.xlu0 %1014
      %1016 = vrot.lane.b32.xlu0 %v610, 8
      %v1017 = vpop.permute.xlu0 %1016
      %1018 = vrot.lane.b32.xlu0 %v611, 8
      %v1019 = vpop.permute.xlu0 %1018
      %1020 = vrot.lane.b32.xlu0 %v612, 8
      %v1021 = vpop.permute.xlu0 %1020
      %1022 = vrot.lane.b32.xlu0 %v613, 8
      %v1023 = vpop.permute.xlu0 %1022
      %1024 = vrot.lane.b32.xlu0 %v614, 8
      %v1025 = vpop.permute.xlu0 %1024
      %1026 = vrot.lane.b32.xlu0 %v615, 8
      %v1027 = vpop.permute.xlu0 %1026
      %1028 = vrot.lane.b32.xlu0 %v616, 8
      %v1029 = vpop.permute.xlu0 %1028
      %1030 = vrot.lane.b32.xlu0 %v617, 8
      %v1031 = vpop.permute.xlu0 %1030
      %1032 = vrot.lane.b32.xlu0 %v618, 8
      %v1033 = vpop.permute.xlu0 %1032
      %1034 = vrot.lane.b32.xlu0 %v619, 8
      %v1035 = vpop.permute.xlu0 %1034
      %1036 = vrot.lane.b32.xlu0 %v620, 8
      %v1037 = vpop.permute.xlu0 %1036
      %1102 = vrot.lane.b32.xlu0 %v621, 12
      %v1103 = vpop.permute.xlu0 %1102
      %1104 = vrot.lane.b32.xlu0 %v622, 12
      %v1105 = vpop.permute.xlu0 %1104
      %1106 = vrot.lane.b32.xlu0 %v623, 12
      %v1107 = vpop.permute.xlu0 %1106
      %1108 = vrot.lane.b32.xlu0 %v624, 12
      %v1109 = vpop.permute.xlu0 %1108
      %1110 = vrot.lane.b32.xlu0 %v625, 12
      %v1111 = vpop.permute.xlu0 %1110
      %1112 = vrot.lane.b32.xlu0 %v626, 12
      %v1113 = vpop.permute.xlu0 %1112
      %1114 = vrot.lane.b32.xlu0 %v627, 12
      %v1115 = vpop.permute.xlu0 %1114
      %1116 = vrot.lane.b32.xlu0 %v628, 12
      %v1117 = vpop.permute.xlu0 %1116
      %1118 = vrot.lane.b32.xlu0 %v629, 12
      %v1119 = vpop.permute.xlu0 %1118
      %1120 = vrot.lane.b32.xlu0 %v630, 12
      %v1121 = vpop.permute.xlu0 %1120
      %1122 = vrot.lane.b32.xlu0 %v631, 12
      %v1123 = vpop.permute.xlu0 %1122
      %1124 = vrot.lane.b32.xlu0 %v632, 12
      %v1125 = vpop.permute.xlu0 %1124
      %1126 = vrot.lane.b32.xlu0 %v633, 12
      %v1127 = vpop.permute.xlu0 %1126
      %1128 = vrot.lane.b32.xlu0 %v634, 12
      %v1129 = vpop.permute.xlu0 %1128
      %1130 = vrot.lane.b32.xlu0 %v635, 12
      %v1131 = vpop.permute.xlu0 %1130
      %1132 = vrot.lane.b32.xlu0 %v636, 12
      %v1133 = vpop.permute.xlu0 %1132
      %1134 = vrot.lane.b32.xlu0 %v637, 12
      %v1135 = vpop.permute.xlu0 %1134
      %1136 = vrot.lane.b32.xlu0 %v638, 12
      %v1137 = vpop.permute.xlu0 %1136
      %1138 = vrot.lane.b32.xlu0 %v639, 12
      %v1139 = vpop.permute.xlu0 %1138
      %1140 = vrot.lane.b32.xlu0 %v640, 12
      %v1141 = vpop.permute.xlu0 %1140
      %1142 = vrot.lane.b32.xlu0 %v641, 12
      %v1143 = vpop.permute.xlu0 %1142
      %1144 = vrot.lane.b32.xlu0 %v642, 12
      %v1145 = vpop.permute.xlu0 %1144
      %1146 = vrot.lane.b32.xlu0 %v643, 12
      %v1147 = vpop.permute.xlu0 %1146
      %1148 = vrot.lane.b32.xlu0 %v644, 12
      %v1149 = vpop.permute.xlu0 %1148
      %1150 = vrot.lane.b32.xlu0 %v645, 12
      %v1151 = vpop.permute.xlu0 %1150
      %1152 = vrot.lane.b32.xlu0 %v646, 12
      %v1153 = vpop.permute.xlu0 %1152
      %1154 = vrot.lane.b32.xlu0 %v647, 12
      %v1155 = vpop.permute.xlu0 %1154
      %1156 = vrot.lane.b32.xlu0 %v648, 12
      %v1157 = vpop.permute.xlu0 %1156
      %1158 = vrot.lane.b32.xlu0 %v649, 12
      %v1159 = vpop.permute.xlu0 %1158
      %1160 = vrot.lane.b32.xlu0 %v650, 12
      %v1161 = vpop.permute.xlu0 %1160
      %1162 = vrot.lane.b32.xlu0 %v651, 12
      %v1163 = vpop.permute.xlu0 %1162
      %1164 = vrot.lane.b32.xlu0 %v652, 12
      %v1165 = vpop.permute.xlu0 %1164
      %1230 = vrot.lane.b32.xlu0 %v653, 16
      %v1231 = vpop.permute.xlu0 %1230
      %1232 = vrot.lane.b32.xlu0 %v654, 16
      %v1233 = vpop.permute.xlu0 %1232
      %1234 = vrot.lane.b32.xlu0 %v655, 16
      %v1235 = vpop.permute.xlu0 %1234
      %1236 = vrot.lane.b32.xlu0 %v656, 16
      %v1237 = vpop.permute.xlu0 %1236
      %1238 = vrot.lane.b32.xlu0 %v657, 16
      %v1239 = vpop.permute.xlu0 %1238
      %1240 = vrot.lane.b32.xlu0 %v658, 16
      %v1241 = vpop.permute.xlu0 %1240
      %1242 = vrot.lane.b32.xlu0 %v659, 16
      %v1243 = vpop.permute.xlu0 %1242
      %1244 = vrot.lane.b32.xlu0 %v660, 16
      %v1245 = vpop.permute.xlu0 %1244
      %1246 = vrot.lane.b32.xlu0 %v661, 16
      %v1247 = vpop.permute.xlu0 %1246
      %1248 = vrot.lane.b32.xlu0 %v662, 16
      %v1249 = vpop.permute.xlu0 %1248
      %1250 = vrot.lane.b32.xlu0 %v663, 16
      %v1251 = vpop.permute.xlu0 %1250
      %1252 = vrot.lane.b32.xlu0 %v664, 16
      %v1253 = vpop.permute.xlu0 %1252
      %1254 = vrot.lane.b32.xlu0 %v665, 16
      %v1255 = vpop.permute.xlu0 %1254
      %1256 = vrot.lane.b32.xlu0 %v666, 16
      %v1257 = vpop.permute.xlu0 %1256
      %1258 = vrot.lane.b32.xlu0 %v667, 16
      %v1259 = vpop.permute.xlu0 %1258
      %1260 = vrot.lane.b32.xlu0 %v668, 16
      %v1261 = vpop.permute.xlu0 %1260
      %1262 = vrot.lane.b32.xlu0 %v669, 16
      %v1263 = vpop.permute.xlu0 %1262
      %1264 = vrot.lane.b32.xlu0 %v670, 16
      %v1265 = vpop.permute.xlu0 %1264
      %1266 = vrot.lane.b32.xlu0 %v671, 16
      %v1267 = vpop.permute.xlu0 %1266
      %1268 = vrot.lane.b32.xlu0 %v672, 16
      %v1269 = vpop.permute.xlu0 %1268
      %1270 = vrot.lane.b32.xlu0 %v673, 16
      %v1271 = vpop.permute.xlu0 %1270
      %1272 = vrot.lane.b32.xlu0 %v674, 16
      %v1273 = vpop.permute.xlu0 %1272
      %1274 = vrot.lane.b32.xlu0 %v675, 16
      %v1275 = vpop.permute.xlu0 %1274
      %1276 = vrot.lane.b32.xlu0 %v676, 16
      %v1277 = vpop.permute.xlu0 %1276
      %1278 = vrot.lane.b32.xlu0 %v677, 16
      %v1279 = vpop.permute.xlu0 %1278
      %1280 = vrot.lane.b32.xlu0 %v678, 16
      %v1281 = vpop.permute.xlu0 %1280
      %1282 = vrot.lane.b32.xlu0 %v679, 16
      %v1283 = vpop.permute.xlu0 %1282
      %1284 = vrot.lane.b32.xlu0 %v680, 16
      %v1285 = vpop.permute.xlu0 %1284
      %1286 = vrot.lane.b32.xlu0 %v681, 16
      %v1287 = vpop.permute.xlu0 %1286
      %1288 = vrot.lane.b32.xlu0 %v682, 16
      %v1289 = vpop.permute.xlu0 %1288
      %1290 = vrot.lane.b32.xlu0 %v683, 16
      %v1291 = vpop.permute.xlu0 %1290
      %1292 = vrot.lane.b32.xlu0 %v684, 16
      %v1293 = vpop.permute.xlu0 %1292
      %1358 = vrot.lane.b32.xlu0 %v685, 20
      %v1359 = vpop.permute.xlu0 %1358
      %1360 = vrot.lane.b32.xlu0 %v686, 20
      %v1361 = vpop.permute.xlu0 %1360
      %1362 = vrot.lane.b32.xlu0 %v687, 20
      %v1363 = vpop.permute.xlu0 %1362
      %1364 = vrot.lane.b32.xlu0 %v688, 20
      %v1365 = vpop.permute.xlu0 %1364
      %1366 = vrot.lane.b32.xlu0 %v689, 20
      %v1367 = vpop.permute.xlu0 %1366
      %1368 = vrot.lane.b32.xlu0 %v690, 20
      %v1369 = vpop.permute.xlu0 %1368
      %1370 = vrot.lane.b32.xlu0 %v691, 20
      %v1371 = vpop.permute.xlu0 %1370
      %1372 = vrot.lane.b32.xlu0 %v692, 20
      %v1373 = vpop.permute.xlu0 %1372
      %1374 = vrot.lane.b32.xlu0 %v693, 20
      %v1375 = vpop.permute.xlu0 %1374
      %1376 = vrot.lane.b32.xlu0 %v694, 20
      %v1377 = vpop.permute.xlu0 %1376
      %1378 = vrot.lane.b32.xlu0 %v695, 20
      %v1379 = vpop.permute.xlu0 %1378
      %1380 = vrot.lane.b32.xlu0 %v696, 20
      %v1381 = vpop.permute.xlu0 %1380
      %1382 = vrot.lane.b32.xlu0 %v697, 20
      %v1383 = vpop.permute.xlu0 %1382
      %1384 = vrot.lane.b32.xlu0 %v698, 20
      %v1385 = vpop.permute.xlu0 %1384
      %1386 = vrot.lane.b32.xlu0 %v699, 20
      %v1387 = vpop.permute.xlu0 %1386
      %1388 = vrot.lane.b32.xlu0 %v700, 20
      %v1389 = vpop.permute.xlu0 %1388
      %1390 = vrot.lane.b32.xlu0 %v701, 20
      %v1391 = vpop.permute.xlu0 %1390
      %1392 = vrot.lane.b32.xlu0 %v702, 20
      %v1393 = vpop.permute.xlu0 %1392
      %1394 = vrot.lane.b32.xlu0 %v703, 20
      %v1395 = vpop.permute.xlu0 %1394
      %1396 = vrot.lane.b32.xlu0 %v704, 20
      %v1397 = vpop.permute.xlu0 %1396
      %1398 = vrot.lane.b32.xlu0 %v705, 20
      %v1399 = vpop.permute.xlu0 %1398
      %1400 = vrot.lane.b32.xlu0 %v706, 20
      %v1401 = vpop.permute.xlu0 %1400
      %1402 = vrot.lane.b32.xlu0 %v707, 20
      %v1403 = vpop.permute.xlu0 %1402
      %1404 = vrot.lane.b32.xlu0 %v708, 20
      %v1405 = vpop.permute.xlu0 %1404
      %1406 = vrot.lane.b32.xlu0 %v709, 20
      %v1407 = vpop.permute.xlu0 %1406
      %1408 = vrot.lane.b32.xlu0 %v710, 20
      %v1409 = vpop.permute.xlu0 %1408
      %1410 = vrot.lane.b32.xlu0 %v711, 20
      %v1411 = vpop.permute.xlu0 %1410
      %1412 = vrot.lane.b32.xlu0 %v712, 20
      %v1413 = vpop.permute.xlu0 %1412
      %1414 = vrot.lane.b32.xlu0 %v713, 20
      %v1415 = vpop.permute.xlu0 %1414
      %1416 = vrot.lane.b32.xlu0 %v714, 20
      %v1417 = vpop.permute.xlu0 %1416
      %1418 = vrot.lane.b32.xlu0 %v715, 20
      %v1419 = vpop.permute.xlu0 %1418
      %1420 = vrot.lane.b32.xlu0 %v716, 20
      %v1421 = vpop.permute.xlu0 %1420
      %1486 = vrot.lane.b32.xlu0 %v718, 24
      %v1487 = vpop.permute.xlu0 %1486
      %1488 = vrot.lane.b32.xlu0 %v719, 24
      %v1489 = vpop.permute.xlu0 %1488
      %1490 = vrot.lane.b32.xlu0 %v720, 24
      %v1491 = vpop.permute.xlu0 %1490
      %1492 = vrot.lane.b32.xlu0 %v721, 24
      %v1493 = vpop.permute.xlu0 %1492
      %1494 = vrot.lane.b32.xlu0 %v722, 24
      %v1495 = vpop.permute.xlu0 %1494
      %1496 = vrot.lane.b32.xlu0 %v723, 24
      %v1497 = vpop.permute.xlu0 %1496
      %1498 = vrot.lane.b32.xlu0 %v724, 24
      %v1499 = vpop.permute.xlu0 %1498
      %1500 = vrot.lane.b32.xlu0 %v725, 24
      %v1501 = vpop.permute.xlu0 %1500
      %1502 = vrot.lane.b32.xlu0 %v726, 24
      %v1503 = vpop.permute.xlu0 %1502
      %1504 = vrot.lane.b32.xlu0 %v727, 24
      %v1505 = vpop.permute.xlu0 %1504
      %1506 = vrot.lane.b32.xlu0 %v728, 24
      %v1507 = vpop.permute.xlu0 %1506
      %1508 = vrot.lane.b32.xlu0 %v729, 24
      %v1509 = vpop.permute.xlu0 %1508
      %1510 = vrot.lane.b32.xlu0 %v730, 24
      %v1511 = vpop.permute.xlu0 %1510
      %1512 = vrot.lane.b32.xlu0 %v731, 24
      %v1513 = vpop.permute.xlu0 %1512
      %1514 = vrot.lane.b32.xlu0 %v732, 24
      %v1515 = vpop.permute.xlu0 %1514
      %1516 = vrot.lane.b32.xlu0 %v733, 24
      %v1517 = vpop.permute.xlu0 %1516
      %1518 = vrot.lane.b32.xlu0 %v734, 24
      %v1519 = vpop.permute.xlu0 %1518
      %1520 = vrot.lane.b32.xlu0 %v735, 24
      %v1521 = vpop.permute.xlu0 %1520
      %1522 = vrot.lane.b32.xlu0 %v736, 24
      %v1523 = vpop.permute.xlu0 %1522
      %1524 = vrot.lane.b32.xlu0 %v737, 24
      %v1525 = vpop.permute.xlu0 %1524
      %1526 = vrot.lane.b32.xlu0 %v738, 24
      %v1527 = vpop.permute.xlu0 %1526
      %1528 = vrot.lane.b32.xlu0 %v739, 24
      %v1529 = vpop.permute.xlu0 %1528
      %1530 = vrot.lane.b32.xlu0 %v740, 24
      %v1531 = vpop.permute.xlu0 %1530
      %1532 = vrot.lane.b32.xlu0 %v741, 24
      %v1533 = vpop.permute.xlu0 %1532
      %1534 = vrot.lane.b32.xlu0 %v742, 24
      %v1535 = vpop.permute.xlu0 %1534
      %1536 = vrot.lane.b32.xlu0 %v743, 24
      %v1537 = vpop.permute.xlu0 %1536
      %1538 = vrot.lane.b32.xlu0 %v744, 24
      %v1539 = vpop.permute.xlu0 %1538
      %1540 = vrot.lane.b32.xlu0 %v745, 24
      %v1541 = vpop.permute.xlu0 %1540
      %1542 = vrot.lane.b32.xlu0 %v746, 24
      %v1543 = vpop.permute.xlu0 %1542
      %1544 = vrot.lane.b32.xlu0 %v747, 24
      %v1545 = vpop.permute.xlu0 %1544
      %1546 = vrot.lane.b32.xlu0 %v748, 24
      %v1547 = vpop.permute.xlu0 %1546
      %1548 = vrot.lane.b32.xlu0 %v749, 24
      %v1549 = vpop.permute.xlu0 %1548
      %1614 = vrot.lane.b32.xlu0 %v750, 28
      %v1615 = vpop.permute.xlu0 %1614
      %1616 = vrot.lane.b32.xlu0 %v751, 28
      %v1617 = vpop.permute.xlu0 %1616
      %1618 = vrot.lane.b32.xlu0 %v752, 28
      %v1619 = vpop.permute.xlu0 %1618
      %1620 = vrot.lane.b32.xlu0 %v753, 28
      %v1621 = vpop.permute.xlu0 %1620
      %1622 = vrot.lane.b32.xlu0 %v754, 28
      %v1623 = vpop.permute.xlu0 %1622
      %1624 = vrot.lane.b32.xlu0 %v755, 28
      %v1625 = vpop.permute.xlu0 %1624
      %1626 = vrot.lane.b32.xlu0 %v756, 28
      %v1627 = vpop.permute.xlu0 %1626
      %1628 = vrot.lane.b32.xlu0 %v757, 28
      %v1629 = vpop.permute.xlu0 %1628
      %1630 = vrot.lane.b32.xlu0 %v758, 28
      %v1631 = vpop.permute.xlu0 %1630
      %1632 = vrot.lane.b32.xlu0 %v759, 28
      %v1633 = vpop.permute.xlu0 %1632
      %1634 = vrot.lane.b32.xlu0 %v760, 28
      %v1635 = vpop.permute.xlu0 %1634
      %1636 = vrot.lane.b32.xlu0 %v761, 28
      %v1637 = vpop.permute.xlu0 %1636
      %1638 = vrot.lane.b32.xlu0 %v762, 28
      %v1639 = vpop.permute.xlu0 %1638
      %1640 = vrot.lane.b32.xlu0 %v763, 28
      %v1641 = vpop.permute.xlu0 %1640
      %1642 = vrot.lane.b32.xlu0 %v764, 28
      %v1643 = vpop.permute.xlu0 %1642
      %1644 = vrot.lane.b32.xlu0 %v765, 28
      %v1645 = vpop.permute.xlu0 %1644
      %1646 = vrot.lane.b32.xlu0 %v766, 28
      %v1647 = vpop.permute.xlu0 %1646
      %1648 = vrot.lane.b32.xlu0 %v767, 28
      %v1649 = vpop.permute.xlu0 %1648
      %1650 = vrot.lane.b32.xlu0 %v768, 28
      %v1651 = vpop.permute.xlu0 %1650
      %1652 = vrot.lane.b32.xlu0 %v769, 28
      %v1653 = vpop.permute.xlu0 %1652
      %1654 = vrot.lane.b32.xlu0 %v770, 28
      %v1655 = vpop.permute.xlu0 %1654
      %1656 = vrot.lane.b32.xlu0 %v771, 28
      %v1657 = vpop.permute.xlu0 %1656
      %1658 = vrot.lane.b32.xlu0 %v772, 28
      %v1659 = vpop.permute.xlu0 %1658
      %1660 = vrot.lane.b32.xlu0 %v773, 28
      %v1661 = vpop.permute.xlu0 %1660
      %1662 = vrot.lane.b32.xlu0 %v774, 28
      %v1663 = vpop.permute.xlu0 %1662
      %1664 = vrot.lane.b32.xlu0 %v775, 28
      %v1665 = vpop.permute.xlu0 %1664
      %1666 = vrot.lane.b32.xlu0 %v776, 28
      %v1667 = vpop.permute.xlu0 %1666
      %1668 = vrot.lane.b32.xlu0 %v777, 28
      %v1669 = vpop.permute.xlu0 %1668
      %1670 = vrot.lane.b32.xlu0 %v778, 28
      %v1671 = vpop.permute.xlu0 %1670
      %1672 = vrot.lane.b32.xlu0 %v779, 28
      %v1673 = vpop.permute.xlu0 %1672
      %1674 = vrot.lane.b32.xlu0 %v780, 28
      %v1675 = vpop.permute.xlu0 %1674
      %1676 = vrot.lane.b32.xlu0 %v781, 28
      %v1677 = vpop.permute.xlu0 %1676
      %1742 = vrot.lane.b32.xlu0 %v782, 32
      %v1743 = vpop.permute.xlu0 %1742
      %1744 = vrot.lane.b32.xlu0 %v783, 32
      %v1745 = vpop.permute.xlu0 %1744
      %1746 = vrot.lane.b32.xlu0 %v784, 32
      %v1747 = vpop.permute.xlu0 %1746
      %1748 = vrot.lane.b32.xlu0 %v785, 32
      %v1749 = vpop.permute.xlu0 %1748
      %1750 = vrot.lane.b32.xlu0 %v786, 32
      %v1751 = vpop.permute.xlu0 %1750
      %1752 = vrot.lane.b32.xlu0 %v787, 32
      %v1753 = vpop.permute.xlu0 %1752
      %1754 = vrot.lane.b32.xlu0 %v788, 32
      %v1755 = vpop.permute.xlu0 %1754
      %1756 = vrot.lane.b32.xlu0 %v789, 32
      %v1757 = vpop.permute.xlu0 %1756
      %1758 = vrot.lane.b32.xlu0 %v790, 32
      %v1759 = vpop.permute.xlu0 %1758
      %1760 = vrot.lane.b32.xlu0 %v791, 32
      %v1761 = vpop.permute.xlu0 %1760
      %1762 = vrot.lane.b32.xlu0 %v792, 32
      %v1763 = vpop.permute.xlu0 %1762
      %1764 = vrot.lane.b32.xlu0 %v793, 32
      %v1765 = vpop.permute.xlu0 %1764
      %1766 = vrot.lane.b32.xlu0 %v794, 32
      %v1767 = vpop.permute.xlu0 %1766
      %1768 = vrot.lane.b32.xlu0 %v795, 32
      %v1769 = vpop.permute.xlu0 %1768
      %1770 = vrot.lane.b32.xlu0 %v796, 32
      %v1771 = vpop.permute.xlu0 %1770
      %1772 = vrot.lane.b32.xlu0 %v797, 32
      %v1773 = vpop.permute.xlu0 %1772
      %1774 = vrot.lane.b32.xlu0 %v798, 32
      %v1775 = vpop.permute.xlu0 %1774
      %1776 = vrot.lane.b32.xlu0 %v799, 32
      %v1777 = vpop.permute.xlu0 %1776
      %1778 = vrot.lane.b32.xlu0 %v800, 32
      %v1779 = vpop.permute.xlu0 %1778
      %1780 = vrot.lane.b32.xlu0 %v801, 32
      %v1781 = vpop.permute.xlu0 %1780
      %1782 = vrot.lane.b32.xlu0 %v802, 32
      %v1783 = vpop.permute.xlu0 %1782
      %1784 = vrot.lane.b32.xlu0 %v803, 32
      %v1785 = vpop.permute.xlu0 %1784
      %1786 = vrot.lane.b32.xlu0 %v804, 32
      %v1787 = vpop.permute.xlu0 %1786
      %1788 = vrot.lane.b32.xlu0 %v805, 32
      %v1789 = vpop.permute.xlu0 %1788
      %1790 = vrot.lane.b32.xlu0 %v806, 32
      %v1791 = vpop.permute.xlu0 %1790
      %1792 = vrot.lane.b32.xlu0 %v807, 32
      %v1793 = vpop.permute.xlu0 %1792
      %1794 = vrot.lane.b32.xlu0 %v808, 32
      %v1795 = vpop.permute.xlu0 %1794
      %1796 = vrot.lane.b32.xlu0 %v809, 32
      %v1797 = vpop.permute.xlu0 %1796
      %1798 = vrot.lane.b32.xlu0 %v810, 32
      %v1799 = vpop.permute.xlu0 %1798
      %1800 = vrot.lane.b32.xlu0 %v811, 32
      %v1801 = vpop.permute.xlu0 %1800
      %1802 = vrot.lane.b32.xlu0 %v812, 32
      %v1803 = vpop.permute.xlu0 %1802
      %1804 = vrot.lane.b32.xlu0 %v813, 32
      %v1805 = vpop.permute.xlu0 %1804
      %v1838 = vsel %vm463, %v525, %v847
      %v1839 = vsel %vm463, %v526, %v849
      %v1840 = vsel %vm463, %v527, %v851
      %v1841 = vsel %vm463, %v528, %v853
      %v1842 = vsel %vm463, %v529, %v855
      %v1843 = vsel %vm463, %v530, %v857
      %v1844 = vsel %vm463, %v531, %v859
      %v1845 = vsel %vm463, %v532, %v861
      %v1846 = vsel %vm463, %v533, %v863
      %v1847 = vsel %vm463, %v534, %v865
      %v1848 = vsel %vm463, %v535, %v867
      %v1849 = vsel %vm463, %v536, %v869
      %v1850 = vsel %vm463, %v537, %v871
      %v1851 = vsel %vm463, %v538, %v873
      %v1852 = vsel %vm463, %v539, %v875
      %v1853 = vsel %vm463, %v540, %v877
      %v1854 = vsel %vm463, %v541, %v879
      %v1855 = vsel %vm463, %v542, %v881
      %v1856 = vsel %vm463, %v543, %v883
      %v1857 = vsel %vm463, %v544, %v885
      %v1858 = vsel %vm463, %v545, %v887
      %v1859 = vsel %vm463, %v546, %v889
      %v1860 = vsel %vm463, %v547, %v891
      %v1861 = vsel %vm463, %v548, %v893
      %v1862 = vsel %vm463, %v549, %v895
      %v1863 = vsel %vm463, %v550, %v897
      %v1864 = vsel %vm463, %v551, %v899
      %v1865 = vsel %vm463, %v552, %v901
      %v1866 = vsel %vm463, %v553, %v903
      %v1867 = vsel %vm463, %v554, %v905
      %v1868 = vsel %vm463, %v555, %v907
      %v1869 = vsel %vm463, %v556, %v909
      %vm1870 = vcmask 64512
      %v1871 = vsel %vm1870, %v1838, %v975
      %v1872 = vsel %vm1870, %v1839, %v977
      %v1873 = vsel %vm1870, %v1840, %v979
      %v1874 = vsel %vm1870, %v1841, %v981
      %v1875 = vsel %vm1870, %v1842, %v983
      %v1876 = vsel %vm1870, %v1843, %v985
      %v1877 = vsel %vm1870, %v1844, %v987
      %v1878 = vsel %vm1870, %v1845, %v989
      %v1879 = vsel %vm1870, %v1846, %v991
      %v1880 = vsel %vm1870, %v1847, %v993
      %v1881 = vsel %vm1870, %v1848, %v995
      %v1882 = vsel %vm1870, %v1849, %v997
      %v1883 = vsel %vm1870, %v1850, %v999
      %v1884 = vsel %vm1870, %v1851, %v1001
      %v1885 = vsel %vm1870, %v1852, %v1003
      %v1886 = vsel %vm1870, %v1853, %v1005
      %v1887 = vsel %vm1870, %v1854, %v1007
      %v1888 = vsel %vm1870, %v1855, %v1009
      %v1889 = vsel %vm1870, %v1856, %v1011
      %v1890 = vsel %vm1870, %v1857, %v1013
      %v1891 = vsel %vm1870, %v1858, %v1015
      %v1892 = vsel %vm1870, %v1859, %v1017
      %v1893 = vsel %vm1870, %v1860, %v1019
      %v1894 = vsel %vm1870, %v1861, %v1021
      %v1895 = vsel %vm1870, %v1862, %v1023
      %v1896 = vsel %vm1870, %v1863, %v1025
      %v1897 = vsel %vm1870, %v1864, %v1027
      %v1898 = vsel %vm1870, %v1865, %v1029
      %v1899 = vsel %vm1870, %v1866, %v1031
      %v1900 = vsel %vm1870, %v1867, %v1033
      %v1901 = vsel %vm1870, %v1868, %v1035
      %v1902 = vsel %vm1870, %v1869, %v1037
      %vm1903 = vcmask 97280
      %v1904 = vsel %vm1903, %v1871, %v1103
      %v1905 = vsel %vm1903, %v1872, %v1105
      %v1906 = vsel %vm1903, %v1873, %v1107
      %v1907 = vsel %vm1903, %v1874, %v1109
      %v1908 = vsel %vm1903, %v1875, %v1111
      %v1909 = vsel %vm1903, %v1876, %v1113
      %v1910 = vsel %vm1903, %v1877, %v1115
      %v1911 = vsel %vm1903, %v1878, %v1117
      %v1912 = vsel %vm1903, %v1879, %v1119
      %v1913 = vsel %vm1903, %v1880, %v1121
      %v1914 = vsel %vm1903, %v1881, %v1123
      %v1915 = vsel %vm1903, %v1882, %v1125
      %v1916 = vsel %vm1903, %v1883, %v1127
      %v1917 = vsel %vm1903, %v1884, %v1129
      %v1918 = vsel %vm1903, %v1885, %v1131
      %v1919 = vsel %vm1903, %v1886, %v1133
      %v1920 = vsel %vm1903, %v1887, %v1135
      %v1921 = vsel %vm1903, %v1888, %v1137
      %v1922 = vsel %vm1903, %v1889, %v1139
      %v1923 = vsel %vm1903, %v1890, %v1141
      %v1924 = vsel %vm1903, %v1891, %v1143
      %v1925 = vsel %vm1903, %v1892, %v1145
      %v1926 = vsel %vm1903, %v1893, %v1147
      %v1927 = vsel %vm1903, %v1894, %v1149
      %v1928 = vsel %vm1903, %v1895, %v1151
      %v1929 = vsel %vm1903, %v1896, %v1153
      %v1930 = vsel %vm1903, %v1897, %v1155
      %v1931 = vsel %vm1903, %v1898, %v1157
      %v1932 = vsel %vm1903, %v1899, %v1159
      %v1933 = vsel %vm1903, %v1900, %v1161
      %v1934 = vsel %vm1903, %v1901, %v1163
      %v1935 = vsel %vm1903, %v1902, %v1165
      %vm1936 = vcmask 130048
      %v1937 = vsel %vm1936, %v1904, %v1231
      %v1938 = vsel %vm1936, %v1905, %v1233
      %v1939 = vsel %vm1936, %v1906, %v1235
      %v1940 = vsel %vm1936, %v1907, %v1237
      %v1941 = vsel %vm1936, %v1908, %v1239
      %v1942 = vsel %vm1936, %v1909, %v1241
      %v1943 = vsel %vm1936, %v1910, %v1243
      %v1944 = vsel %vm1936, %v1911, %v1245
      %v1945 = vsel %vm1936, %v1912, %v1247
      %v1946 = vsel %vm1936, %v1913, %v1249
      %v1947 = vsel %vm1936, %v1914, %v1251
      %v1948 = vsel %vm1936, %v1915, %v1253
      %v1949 = vsel %vm1936, %v1916, %v1255
      %v1950 = vsel %vm1936, %v1917, %v1257
      %v1951 = vsel %vm1936, %v1918, %v1259
      %v1952 = vsel %vm1936, %v1919, %v1261
      %v1953 = vsel %vm1936, %v1920, %v1263
      %v1954 = vsel %vm1936, %v1921, %v1265
      %v1955 = vsel %vm1936, %v1922, %v1267
      %v1956 = vsel %vm1936, %v1923, %v1269
      %v1957 = vsel %vm1936, %v1924, %v1271
      %v1958 = vsel %vm1936, %v1925, %v1273
      %v1959 = vsel %vm1936, %v1926, %v1275
      %v1960 = vsel %vm1936, %v1927, %v1277
      %v1961 = vsel %vm1936, %v1928, %v1279
      %v1962 = vsel %vm1936, %v1929, %v1281
      %v1963 = vsel %vm1936, %v1930, %v1283
      %v1964 = vsel %vm1936, %v1931, %v1285
      %v1965 = vsel %vm1936, %v1932, %v1287
      %v1966 = vsel %vm1936, %v1933, %v1289
      %v1967 = vsel %vm1936, %v1934, %v1291
      %v1968 = vsel %vm1936, %v1935, %v1293
      %vm1969 = vcmask 162816
      %v1970 = vsel %vm1969, %v1937, %v1359
      %v1971 = vsel %vm1969, %v1938, %v1361
      %v1972 = vsel %vm1969, %v1939, %v1363
      %v1973 = vsel %vm1969, %v1940, %v1365
      %v1974 = vsel %vm1969, %v1941, %v1367
      %v1975 = vsel %vm1969, %v1942, %v1369
      %v1976 = vsel %vm1969, %v1943, %v1371
      %v1977 = vsel %vm1969, %v1944, %v1373
      %v1978 = vsel %vm1969, %v1945, %v1375
      %v1979 = vsel %vm1969, %v1946, %v1377
      %v1980 = vsel %vm1969, %v1947, %v1379
      %v1981 = vsel %vm1969, %v1948, %v1381
      %v1982 = vsel %vm1969, %v1949, %v1383
      %v1983 = vsel %vm1969, %v1950, %v1385
      %v1984 = vsel %vm1969, %v1951, %v1387
      %v1985 = vsel %vm1969, %v1952, %v1389
      %v1986 = vsel %vm1969, %v1953, %v1391
      %v1987 = vsel %vm1969, %v1954, %v1393
      %v1988 = vsel %vm1969, %v1955, %v1395
      %v1989 = vsel %vm1969, %v1956, %v1397
      %v1990 = vsel %vm1969, %v1957, %v1399
      %v1991 = vsel %vm1969, %v1958, %v1401
      %v1992 = vsel %vm1969, %v1959, %v1403
      %v1993 = vsel %vm1969, %v1960, %v1405
      %v1994 = vsel %vm1969, %v1961, %v1407
      %v1995 = vsel %vm1969, %v1962, %v1409
      %v1996 = vsel %vm1969, %v1963, %v1411
      %v1997 = vsel %vm1969, %v1964, %v1413
      %v1998 = vsel %vm1969, %v1965, %v1415
      %v1999 = vsel %vm1969, %v1966, %v1417
      %v2000 = vsel %vm1969, %v1967, %v1419
      %v2001 = vsel %vm1969, %v1968, %v1421
      %vm2002 = vcmask 195584
      %v2003 = vsel %vm2002, %v1970, %v1487
      %v2004 = vsel %vm2002, %v1971, %v1489
      %v2005 = vsel %vm2002, %v1972, %v1491
      %v2006 = vsel %vm2002, %v1973, %v1493
      %v2007 = vsel %vm2002, %v1974, %v1495
      %v2008 = vsel %vm2002, %v1975, %v1497
      %v2009 = vsel %vm2002, %v1976, %v1499
      %v2010 = vsel %vm2002, %v1977, %v1501
      %v2011 = vsel %vm2002, %v1978, %v1503
      %v2012 = vsel %vm2002, %v1979, %v1505
      %v2013 = vsel %vm2002, %v1980, %v1507
      %v2014 = vsel %vm2002, %v1981, %v1509
      %v2015 = vsel %vm2002, %v1982, %v1511
      %v2016 = vsel %vm2002, %v1983, %v1513
      %v2017 = vsel %vm2002, %v1984, %v1515
      %v2018 = vsel %vm2002, %v1985, %v1517
      %v2019 = vsel %vm2002, %v1986, %v1519
      %v2020 = vsel %vm2002, %v1987, %v1521
      %v2021 = vsel %vm2002, %v1988, %v1523
      %v2022 = vsel %vm2002, %v1989, %v1525
      %v2023 = vsel %vm2002, %v1990, %v1527
      %v2024 = vsel %vm2002, %v1991, %v1529
      %v2025 = vsel %vm2002, %v1992, %v1531
      %v2026 = vsel %vm2002, %v1993, %v1533
      %v2027 = vsel %vm2002, %v1994, %v1535
      %v2028 = vsel %vm2002, %v1995, %v1537
      %v2029 = vsel %vm2002, %v1996, %v1539
      %v2030 = vsel %vm2002, %v1997, %v1541
      %v2031 = vsel %vm2002, %v1998, %v1543
      %v2032 = vsel %vm2002, %v1999, %v1545
      %v2033 = vsel %vm2002, %v2000, %v1547
      %v2034 = vsel %vm2002, %v2001, %v1549
      %vm2035 = vcmask 228352
      %v2036 = vsel %vm2035, %v2003, %v1615
      %v2037 = vsel %vm2035, %v2004, %v1617
      %v2038 = vsel %vm2035, %v2005, %v1619
      %v2039 = vsel %vm2035, %v2006, %v1621
      %v2040 = vsel %vm2035, %v2007, %v1623
      %v2041 = vsel %vm2035, %v2008, %v1625
      %v2042 = vsel %vm2035, %v2009, %v1627
      %v2043 = vsel %vm2035, %v2010, %v1629
      %v2044 = vsel %vm2035, %v2011, %v1631
      %v2045 = vsel %vm2035, %v2012, %v1633
      %v2046 = vsel %vm2035, %v2013, %v1635
      %v2047 = vsel %vm2035, %v2014, %v1637
      %v2048 = vsel %vm2035, %v2015, %v1639
      %v2049 = vsel %vm2035, %v2016, %v1641
      %v2050 = vsel %vm2035, %v2017, %v1643
      %v2051 = vsel %vm2035, %v2018, %v1645
      %v2052 = vsel %vm2035, %v2019, %v1647
      %v2053 = vsel %vm2035, %v2020, %v1649
      %v2054 = vsel %vm2035, %v2021, %v1651
      %v2055 = vsel %vm2035, %v2022, %v1653
      %v2056 = vsel %vm2035, %v2023, %v1655
      %v2057 = vsel %vm2035, %v2024, %v1657
      %v2058 = vsel %vm2035, %v2025, %v1659
      %v2059 = vsel %vm2035, %v2026, %v1661
      %v2060 = vsel %vm2035, %v2027, %v1663
      %v2061 = vsel %vm2035, %v2028, %v1665
      %v2062 = vsel %vm2035, %v2029, %v1667
      %v2063 = vsel %vm2035, %v2030, %v1669
      %v2064 = vsel %vm2035, %v2031, %v1671
      %v2065 = vsel %vm2035, %v2032, %v1673
      %v2066 = vsel %vm2035, %v2033, %v1675
      %v2067 = vsel %vm2035, %v2034, %v1677
      %vm2068 = vcmask 261120
      %v2069 = vsel %vm2068, %v2036, %v1743
      %v2070 = vsel %vm2068, %v2037, %v1745
      %v2071 = vsel %vm2068, %v2038, %v1747
      %v2072 = vsel %vm2068, %v2039, %v1749
      %v2073 = vsel %vm2068, %v2040, %v1751
      %v2074 = vsel %vm2068, %v2041, %v1753
      %v2075 = vsel %vm2068, %v2042, %v1755
      %v2076 = vsel %vm2068, %v2043, %v1757
      %v2077 = vsel %vm2068, %v2044, %v1759
      %v2078 = vsel %vm2068, %v2045, %v1761
      %v2079 = vsel %vm2068, %v2046, %v1763
      %v2080 = vsel %vm2068, %v2047, %v1765
      %v2081 = vsel %vm2068, %v2048, %v1767
      %v2082 = vsel %vm2068, %v2049, %v1769
      %v2083 = vsel %vm2068, %v2050, %v1771
      %v2084 = vsel %vm2068, %v2051, %v1773
      %v2085 = vsel %vm2068, %v2052, %v1775
      %v2086 = vsel %vm2068, %v2053, %v1777
      %v2087 = vsel %vm2068, %v2054, %v1779
      %v2088 = vsel %vm2068, %v2055, %v1781
      %v2089 = vsel %vm2068, %v2056, %v1783
      %v2090 = vsel %vm2068, %v2057, %v1785
      %v2091 = vsel %vm2068, %v2058, %v1787
      %v2092 = vsel %vm2068, %v2059, %v1789
      %v2093 = vsel %vm2068, %v2060, %v1791
      %v2094 = vsel %vm2068, %v2061, %v1793
      %v2095 = vsel %vm2068, %v2062, %v1795
      %v2096 = vsel %vm2068, %v2063, %v1797
      %v2097 = vsel %vm2068, %v2064, %v1799
      %v2098 = vsel %vm2068, %v2065, %v1801
      %v2099 = vsel %vm2068, %v2066, %v1803
      %v2100 = vsel %vm2068, %v2067, %v1805
      %v2101 = vld [vmem:[%s3] sm:$0xff]
      %v2102 = vld [vmem:[%s3 + $0x8] sm:$0xff]
      %v2103 = vld [vmem:[%s3 + $0x10] sm:$0xff]
      %v2104 = vld [vmem:[%s3 + $0x18] sm:$0xff]
      %v2105 = vld [vmem:[%s3 + $0x20] sm:$0xf]
      %v2106 = vld [vmem:[%s4] sm:$0x1]
      %v2108 = vlaneseq
      %v2109 = vshrl.u32 %v2108, 7
      %v2110 = vsub.s32 0, %v2109
      %v2111 = vrot.slane %v2106, %v2110
      %vm2113 = vcmask 293888
      %v2115 = vsel %vm2113, %v2069, 0
      %v2118 = vsel %vm2113, %v2070, 0
      %v2121 = vsel %vm2113, %v2071, 0
      %v2124 = vsel %vm2113, %v2072, 0
      %v2127 = vsel %vm2113, %v2073, 0
      %v2130 = vsel %vm2113, %v2074, 0
      %v2133 = vsel %vm2113, %v2075, 0
      %v2136 = vsel %vm2113, %v2076, 0
      %v2139 = vsel %vm2113, %v2077, 0
      %v2142 = vsel %vm2113, %v2078, 0
      %v2145 = vsel %vm2113, %v2079, 0
      %v2148 = vsel %vm2113, %v2080, 0
      %v2151 = vsel %vm2113, %v2081, 0
      %v2154 = vsel %vm2113, %v2082, 0
      %v2157 = vsel %vm2113, %v2083, 0
      %v2160 = vsel %vm2113, %v2084, 0
      %v2163 = vsel %vm2113, %v2085, 0
      %v2166 = vsel %vm2113, %v2086, 0
      %v2169 = vsel %vm2113, %v2087, 0
      %v2172 = vsel %vm2113, %v2088, 0
      %v2175 = vsel %vm2113, %v2089, 0
      %v2178 = vsel %vm2113, %v2090, 0
      %v2181 = vsel %vm2113, %v2091, 0
      %v2184 = vsel %vm2113, %v2092, 0
      %v2187 = vsel %vm2113, %v2093, 0
      %v2190 = vsel %vm2113, %v2094, 0
      %v2193 = vsel %vm2113, %v2095, 0
      %v2196 = vsel %vm2113, %v2096, 0
      %v2199 = vsel %vm2113, %v2097, 0
      %v2202 = vsel %vm2113, %v2098, 0
      %v2205 = vsel %vm2113, %v2099, 0
      %v2208 = vsel %vm2113, %v2100, 0
      %vm2210 = vcmask 1043456
      %v2212 = vsel %vm2210, %v2105, 0
      %2214 = vmatprep.subr.mxu0 0.0
      %2215 = vmatpush1.msra.mxu0 0.0
      %2216 = vmatprep.subr.mxu0 0.0
      %2217 = vmatpush1.msra.mxu0 0.0
      %2218 = vmatprep.subr.mxu0 0.0
      %2219 = vmatpush1.msra.mxu0 0.0
      %2220 = vmatprep.subr.mxu0 0.0
      %2221 = vmatpush1.msra.mxu0 0.0
      %2222 = vmatprep.subr.mxu0 0.0
      %2223 = vmatpush1.msra.mxu0 0.0
      %2224 = vmatprep.subr.mxu0 0.0
      %2225 = vmatpush1.msra.mxu0 0.0
      %2226 = vmatprep.subr.mxu0 0.0
      %2227 = vmatpush1.msra.mxu0 0.0
      %2228 = vmatprep.subr.mxu0 0.0
      %2229 = vmatpush1.msra.mxu0 0.0
      %2230 = vmatprep.subr.mxu0 0.0
      %2231 = vmatpush1.msra.mxu0 0.0
      %2232 = vmatprep.subr.mxu0 0.0
      %2233 = vmatpush1.msra.mxu0 0.0
      %2234 = vmatprep.subr.mxu0 0.0
      %2235 = vmatpush1.msra.mxu0 0.0
      %2236 = vmatprep.subr.mxu0 0.0
      %2237 = vmatpush1.msra.mxu0 %v2212
      %2238 = vmatprep.subr.mxu0 0.0
      %2239 = vmatpush1.msra.mxu0 %v2104
      %2240 = vmatprep.subr.mxu0 0.0
      %2241 = vmatpush1.msra.mxu0 %v2103
      %2242 = vmatprep.subr.mxu0 0.0
      %2243 = vmatpush1.msra.mxu0 %v2102
      %2244 = vmatprep.subr.mxu0 0.0
      %2245 = vmatpush1.msra.mxu0 %v2101
      %2246 = vmatprep.subr.mxu0 0.0
      %2247 = vmatpush2.msra.mxu0 0.0
      %2248 = vmatprep.subr.mxu0 0.0
      %2249 = vmatpush2.msra.mxu0 0.0
      %2250 = vmatprep.subr.mxu0 0.0
      %2251 = vmatpush2.msra.mxu0 0.0
      %2252 = vmatprep.subr.mxu0 0.0
      %2253 = vmatpush2.msra.mxu0 0.0
      %2254 = vmatprep.subr.mxu0 0.0
      %2255 = vmatpush2.msra.mxu0 0.0
      %2256 = vmatprep.subr.mxu0 0.0
      %2257 = vmatpush2.msra.mxu0 0.0
      %2258 = vmatprep.subr.mxu0 0.0
      %2259 = vmatpush2.msra.mxu0 0.0
      %2260 = vmatprep.subr.mxu0 0.0
      %2261 = vmatpush2.msra.mxu0 0.0
      %2262 = vmatprep.subr.mxu0 0.0
      %2263 = vmatpush2.msra.mxu0 0.0
      %2264 = vmatprep.subr.mxu0 0.0
      %2265 = vmatpush2.msra.mxu0 0.0
      %2266 = vmatprep.subr.mxu0 0.0
      %2267 = vmatpush2.msra.mxu0 0.0
      %2268 = vmatprep.subr.mxu0 0.0
      %2269 = vmatpush2.msra.mxu0 0.0
      %2270 = vmatprep.subr.mxu0 0.0
      %2271 = vmatpush2.msra.mxu0 0.0
      %2272 = vmatprep.subr.mxu0 0.0
      %2273 = vmatpush2.msra.mxu0 0.0
      %2274 = vmatprep.subr.mxu0 0.0
      %2275 = vmatpush2.msra.mxu0 0.0
      %2276 = vmatprep.subr.mxu0 0.0
      %2277 = vmatpush2.msra.mxu0 0.0
      %2278 = vmatprep.mubr.f32.mxu0 0.0
      %2279 = vmatmul.mubr.f32.gmra.mxu0 %v2115
      %v2280 = vpop.f32.mrf.mxu0
      %v2281 = vadd.f32 %v2111, %v2280
      %v2282 = vpop.f32.mrf.mxu0
      %2283 = vmatprep.mubr.f32.mxu0 0.0
      %2284 = vmatmul.mubr.f32.gmra.mxu0 %v2118
      %v2285 = vpop.f32.mrf.mxu0
      %v2286 = vadd.f32 %v2111, %v2285
      %v2287 = vpop.f32.mrf.mxu0
      %2288 = vmatprep.mubr.f32.mxu0 0.0
      %2289 = vmatmul.mubr.f32.gmra.mxu0 %v2121
      %v2290 = vpop.f32.mrf.mxu0
      %v2291 = vadd.f32 %v2111, %v2290
      %v2292 = vpop.f32.mrf.mxu0
      %2293 = vmatprep.mubr.f32.mxu0 0.0
      %2294 = vmatmul.mubr.f32.gmra.mxu0 %v2124
      %v2295 = vpop.f32.mrf.mxu0
      %v2296 = vadd.f32 %v2111, %v2295
      %v2297 = vpop.f32.mrf.mxu0
      %2298 = vmatprep.mubr.f32.mxu0 0.0
      %2299 = vmatmul.mubr.f32.gmra.mxu0 %v2127
      %v2300 = vpop.f32.mrf.mxu0
      %v2301 = vadd.f32 %v2111, %v2300
      %v2302 = vpop.f32.mrf.mxu0
      %2303 = vmatprep.mubr.f32.mxu0 0.0
      %2304 = vmatmul.mubr.f32.gmra.mxu0 %v2130
      %v2305 = vpop.f32.mrf.mxu0
      %v2306 = vadd.f32 %v2111, %v2305
      %v2307 = vpop.f32.mrf.mxu0
      %2308 = vmatprep.mubr.f32.mxu0 0.0
      %2309 = vmatmul.mubr.f32.gmra.mxu0 %v2133
      %v2310 = vpop.f32.mrf.mxu0
      %v2311 = vadd.f32 %v2111, %v2310
      %v2312 = vpop.f32.mrf.mxu0
      %2313 = vmatprep.mubr.f32.mxu0 0.0
      %2314 = vmatmul.mubr.f32.gmra.mxu0 %v2136
      %v2315 = vpop.f32.mrf.mxu0
      %v2316 = vadd.f32 %v2111, %v2315
      %v2317 = vpop.f32.mrf.mxu0
      %2318 = vmatprep.mubr.f32.mxu0 0.0
      %2319 = vmatmul.mubr.f32.gmra.mxu0 %v2139
      %v2320 = vpop.f32.mrf.mxu0
      %v2321 = vadd.f32 %v2111, %v2320
      %v2322 = vpop.f32.mrf.mxu0
      %2323 = vmatprep.mubr.f32.mxu0 0.0
      %2324 = vmatmul.mubr.f32.gmra.mxu0 %v2142
      %v2325 = vpop.f32.mrf.mxu0
      %v2326 = vadd.f32 %v2111, %v2325
      %v2327 = vpop.f32.mrf.mxu0
      %2328 = vmatprep.mubr.f32.mxu0 0.0
      %2329 = vmatmul.mubr.f32.gmra.mxu0 %v2145
      %v2330 = vpop.f32.mrf.mxu0
      %v2331 = vadd.f32 %v2111, %v2330
      %v2332 = vpop.f32.mrf.mxu0
      %2333 = vmatprep.mubr.f32.mxu0 0.0
      %2334 = vmatmul.mubr.f32.gmra.mxu0 %v2148
      %v2335 = vpop.f32.mrf.mxu0
      %v2336 = vadd.f32 %v2111, %v2335
      %v2337 = vpop.f32.mrf.mxu0
      %2338 = vmatprep.mubr.f32.mxu0 0.0
      %2339 = vmatmul.mubr.f32.gmra.mxu0 %v2151
      %v2340 = vpop.f32.mrf.mxu0
      %v2341 = vadd.f32 %v2111, %v2340
      %v2342 = vpop.f32.mrf.mxu0
      %2343 = vmatprep.mubr.f32.mxu0 0.0
      %2344 = vmatmul.mubr.f32.gmra.mxu0 %v2154
      %v2345 = vpop.f32.mrf.mxu0
      %v2346 = vadd.f32 %v2111, %v2345
      %v2347 = vpop.f32.mrf.mxu0
      %2348 = vmatprep.mubr.f32.mxu0 0.0
      %2349 = vmatmul.mubr.f32.gmra.mxu0 %v2157
      %v2350 = vpop.f32.mrf.mxu0
      %v2351 = vadd.f32 %v2111, %v2350
      %v2352 = vpop.f32.mrf.mxu0
      %2353 = vmatprep.mubr.f32.mxu0 0.0
      %2354 = vmatmul.mubr.f32.gmra.mxu0 %v2160
      %v2355 = vpop.f32.mrf.mxu0
      %v2356 = vadd.f32 %v2111, %v2355
      %v2357 = vpop.f32.mrf.mxu0
      %2358 = vmatprep.mubr.f32.mxu0 0.0
      %2359 = vmatmul.mubr.f32.gmra.mxu0 %v2163
      %v2360 = vpop.f32.mrf.mxu0
      %v2361 = vadd.f32 %v2111, %v2360
      %v2362 = vpop.f32.mrf.mxu0
      %2363 = vmatprep.mubr.f32.mxu0 0.0
      %2364 = vmatmul.mubr.f32.gmra.mxu0 %v2166
      %v2365 = vpop.f32.mrf.mxu0
      %v2366 = vadd.f32 %v2111, %v2365
      %v2367 = vpop.f32.mrf.mxu0
      %2368 = vmatprep.mubr.f32.mxu0 0.0
      %2369 = vmatmul.mubr.f32.gmra.mxu0 %v2169
      %v2370 = vpop.f32.mrf.mxu0
      %v2371 = vadd.f32 %v2111, %v2370
      %v2372 = vpop.f32.mrf.mxu0
      %2373 = vmatprep.mubr.f32.mxu0 0.0
      %2374 = vmatmul.mubr.f32.gmra.mxu0 %v2172
      %v2375 = vpop.f32.mrf.mxu0
      %v2376 = vadd.f32 %v2111, %v2375
      %v2377 = vpop.f32.mrf.mxu0
      %2378 = vmatprep.mubr.f32.mxu0 0.0
      %2379 = vmatmul.mubr.f32.gmra.mxu0 %v2175
      %v2380 = vpop.f32.mrf.mxu0
      %v2381 = vadd.f32 %v2111, %v2380
      %v2382 = vpop.f32.mrf.mxu0
      %2383 = vmatprep.mubr.f32.mxu0 0.0
      %2384 = vmatmul.mubr.f32.gmra.mxu0 %v2178
      %v2385 = vpop.f32.mrf.mxu0
      %v2386 = vadd.f32 %v2111, %v2385
      %v2387 = vpop.f32.mrf.mxu0
      %2388 = vmatprep.mubr.f32.mxu0 0.0
      %2389 = vmatmul.mubr.f32.gmra.mxu0 %v2181
      %v2390 = vpop.f32.mrf.mxu0
      %v2391 = vadd.f32 %v2111, %v2390
      %v2392 = vpop.f32.mrf.mxu0
      %2393 = vmatprep.mubr.f32.mxu0 0.0
      %2394 = vmatmul.mubr.f32.gmra.mxu0 %v2184
      %v2395 = vpop.f32.mrf.mxu0
      %v2396 = vadd.f32 %v2111, %v2395
      %v2397 = vpop.f32.mrf.mxu0
      %2398 = vmatprep.mubr.f32.mxu0 0.0
      %2399 = vmatmul.mubr.f32.gmra.mxu0 %v2187
      %v2400 = vpop.f32.mrf.mxu0
      %v2401 = vadd.f32 %v2111, %v2400
      %v2402 = vpop.f32.mrf.mxu0
      %2403 = vmatprep.mubr.f32.mxu0 0.0
      %2404 = vmatmul.mubr.f32.gmra.mxu0 %v2190
      %v2405 = vpop.f32.mrf.mxu0
      %v2406 = vadd.f32 %v2111, %v2405
      %v2407 = vpop.f32.mrf.mxu0
      %2408 = vmatprep.mubr.f32.mxu0 0.0
      %2409 = vmatmul.mubr.f32.gmra.mxu0 %v2193
      %v2410 = vpop.f32.mrf.mxu0
      %v2411 = vadd.f32 %v2111, %v2410
      %v2412 = vpop.f32.mrf.mxu0
      %2413 = vmatprep.mubr.f32.mxu0 0.0
      %2414 = vmatmul.mubr.f32.gmra.mxu0 %v2196
      %v2415 = vpop.f32.mrf.mxu0
      %v2416 = vadd.f32 %v2111, %v2415
      %v2417 = vpop.f32.mrf.mxu0
      %2418 = vmatprep.mubr.f32.mxu0 0.0
      %2419 = vmatmul.mubr.f32.gmra.mxu0 %v2199
      %v2420 = vpop.f32.mrf.mxu0
      %v2421 = vadd.f32 %v2111, %v2420
      %v2422 = vpop.f32.mrf.mxu0
      %2423 = vmatprep.mubr.f32.mxu0 0.0
      %2424 = vmatmul.mubr.f32.gmra.mxu0 %v2202
      %v2425 = vpop.f32.mrf.mxu0
      %v2426 = vadd.f32 %v2111, %v2425
      %v2427 = vpop.f32.mrf.mxu0
      %2428 = vmatprep.mubr.f32.mxu0 0.0
      %2429 = vmatmul.mubr.f32.gmra.mxu0 %v2205
      %v2430 = vpop.f32.mrf.mxu0
      %v2431 = vadd.f32 %v2111, %v2430
      %v2432 = vpop.f32.mrf.mxu0
      %2433 = vmatprep.mubr.f32.mxu0 0.0
      %2434 = vmatmul.mubr.f32.gmra.mxu0 %v2208
      %v2435 = vpop.f32.mrf.mxu0
      %v2436 = vadd.f32 %v2111, %v2435
      %v2437 = vpop.f32.mrf.mxu0
      %2438 = vdwg.mxu0
      %v2439 = vld [vmem:[%s346] sm:$0xff]
      %v2440 = vld [vmem:[%s346 + $0x8] sm:$0xff]
      %v2441 = vld [vmem:[%s346 + $0x10] sm:$0xff]
      %v2442 = vld [vmem:[%s346 + $0x18] sm:$0xff]
      %v2443 = vld [vmem:[%s346 + $0x20] sm:$0xff]
      %v2444 = vld [vmem:[%s346 + $0x28] sm:$0xff]
      %v2445 = vld [vmem:[%s346 + $0x30] sm:$0xff]
      %v2446 = vld [vmem:[%s346 + $0x38] sm:$0xff]
      %v2447 = vld [vmem:[%s346 + $0x40] sm:$0xff]
      %v2448 = vld [vmem:[%s346 + $0x48] sm:$0xff]
      %v2449 = vld [vmem:[%s346 + $0x50] sm:$0xff]
      %v2450 = vld [vmem:[%s346 + $0x58] sm:$0xff]
      %v2451 = vld [vmem:[%s346 + $0x60] sm:$0xff]
      %v2452 = vld [vmem:[%s346 + $0x68] sm:$0xff]
      %v2453 = vld [vmem:[%s346 + $0x70] sm:$0xff]
      %v2454 = vld [vmem:[%s346 + $0x78] sm:$0xff]
      %v2455 = vld [vmem:[%s346 + $0x80] sm:$0xff]
      %v2456 = vld [vmem:[%s346 + $0x88] sm:$0xff]
      %v2457 = vld [vmem:[%s346 + $0x90] sm:$0xff]
      %v2458 = vld [vmem:[%s346 + $0x98] sm:$0xff]
      %v2459 = vld [vmem:[%s346 + $0xa0] sm:$0xff]
      %v2460 = vld [vmem:[%s346 + $0xa8] sm:$0xff]
      %v2461 = vld [vmem:[%s346 + $0xb0] sm:$0xff]
      %v2462 = vld [vmem:[%s346 + $0xb8] sm:$0xff]
      %v2463 = vld [vmem:[%s346 + $0xc0] sm:$0xff]
      %v2464 = vld [vmem:[%s346 + $0xc8] sm:$0xff]
      %v2465 = vld [vmem:[%s346 + $0xd0] sm:$0xff]
      %v2466 = vld [vmem:[%s346 + $0xd8] sm:$0xff]
      %v2467 = vld [vmem:[%s346 + $0xe0] sm:$0xff]
      %v2468 = vld [vmem:[%s346 + $0xe8] sm:$0xff]
      %v2469 = vld [vmem:[%s346 + $0xf0] sm:$0xff]
      %v2470 = vld [vmem:[%s346 + $0xf8] sm:$0xff]
      %v2471 = vadd.f32 %v2281, %v2439
      %v2472 = vadd.f32 %v2286, %v2440
      %v2473 = vadd.f32 %v2291, %v2441
      %v2474 = vadd.f32 %v2296, %v2442
      %v2475 = vadd.f32 %v2301, %v2443
      %v2476 = vadd.f32 %v2306, %v2444
      %v2477 = vadd.f32 %v2311, %v2445
      %v2478 = vadd.f32 %v2316, %v2446
      %v2479 = vadd.f32 %v2321, %v2447
      %v2480 = vadd.f32 %v2326, %v2448
      %v2481 = vadd.f32 %v2331, %v2449
      %v2482 = vadd.f32 %v2336, %v2450
      %v2483 = vadd.f32 %v2341, %v2451
      %v2484 = vadd.f32 %v2346, %v2452
      %v2485 = vadd.f32 %v2351, %v2453
      %v2486 = vadd.f32 %v2356, %v2454
      %v2487 = vadd.f32 %v2361, %v2455
      %v2488 = vadd.f32 %v2366, %v2456
      %v2489 = vadd.f32 %v2371, %v2457
      %v2490 = vadd.f32 %v2376, %v2458
      %v2491 = vadd.f32 %v2381, %v2459
      %v2492 = vadd.f32 %v2386, %v2460
      %v2493 = vadd.f32 %v2391, %v2461
      %v2494 = vadd.f32 %v2396, %v2462
      %v2495 = vadd.f32 %v2401, %v2463
      %v2496 = vadd.f32 %v2406, %v2464
      %v2497 = vadd.f32 %v2411, %v2465
      %v2498 = vadd.f32 %v2416, %v2466
      %v2499 = vadd.f32 %v2421, %v2467
      %v2500 = vadd.f32 %v2426, %v2468
      %v2501 = vadd.f32 %v2431, %v2469
      %v2502 = vadd.f32 %v2436, %v2470
      %vm2503 = vcmp.ge.f32.partialorder %v2471, 0.0
      %vm2504 = vcmp.ge.f32.partialorder %v2472, 0.0
      %vm2505 = vcmp.ge.f32.partialorder %v2473, 0.0
      %vm2506 = vcmp.ge.f32.partialorder %v2474, 0.0
      %vm2507 = vcmp.ge.f32.partialorder %v2475, 0.0
      %vm2508 = vcmp.ge.f32.partialorder %v2476, 0.0
      %vm2509 = vcmp.ge.f32.partialorder %v2477, 0.0
      %vm2510 = vcmp.ge.f32.partialorder %v2478, 0.0
      %vm2511 = vcmp.ge.f32.partialorder %v2479, 0.0
      %vm2512 = vcmp.ge.f32.partialorder %v2480, 0.0
      %vm2513 = vcmp.ge.f32.partialorder %v2481, 0.0
      %vm2514 = vcmp.ge.f32.partialorder %v2482, 0.0
      %vm2515 = vcmp.ge.f32.partialorder %v2483, 0.0
      %vm2516 = vcmp.ge.f32.partialorder %v2484, 0.0
      %vm2517 = vcmp.ge.f32.partialorder %v2485, 0.0
      %vm2518 = vcmp.ge.f32.partialorder %v2486, 0.0
      %vm2519 = vcmp.ge.f32.partialorder %v2487, 0.0
      %vm2520 = vcmp.ge.f32.partialorder %v2488, 0.0
      %vm2521 = vcmp.ge.f32.partialorder %v2489, 0.0
      %vm2522 = vcmp.ge.f32.partialorder %v2490, 0.0
      %vm2523 = vcmp.ge.f32.partialorder %v2491, 0.0
      %vm2524 = vcmp.ge.f32.partialorder %v2492, 0.0
      %vm2525 = vcmp.ge.f32.partialorder %v2493, 0.0
      %vm2526 = vcmp.ge.f32.partialorder %v2494, 0.0
      %vm2527 = vcmp.ge.f32.partialorder %v2495, 0.0
      %vm2528 = vcmp.ge.f32.partialorder %v2496, 0.0
      %vm2529 = vcmp.ge.f32.partialorder %v2497, 0.0
      %vm2530 = vcmp.ge.f32.partialorder %v2498, 0.0
      %vm2531 = vcmp.ge.f32.partialorder %v2499, 0.0
      %vm2532 = vcmp.ge.f32.partialorder %v2500, 0.0
      %vm2533 = vcmp.ge.f32.partialorder %v2501, 0.0
      %vm2534 = vcmp.ge.f32.partialorder %v2502, 0.0
      %v2535 = vmul.f32 %v2471, 0.2
      %v2536 = vmul.f32 %v2472, 0.2
      %v2537 = vmul.f32 %v2473, 0.2
      %v2538 = vmul.f32 %v2474, 0.2
      %v2539 = vmul.f32 %v2475, 0.2
      %v2540 = vmul.f32 %v2476, 0.2
      %v2541 = vmul.f32 %v2477, 0.2
      %v2542 = vmul.f32 %v2478, 0.2
      %v2543 = vmul.f32 %v2479, 0.2
      %v2544 = vmul.f32 %v2480, 0.2
      %v2545 = vmul.f32 %v2481, 0.2
      %v2546 = vmul.f32 %v2482, 0.2
      %v2547 = vmul.f32 %v2483, 0.2
      %v2548 = vmul.f32 %v2484, 0.2
      %v2549 = vmul.f32 %v2485, 0.2
      %v2550 = vmul.f32 %v2486, 0.2
      %v2551 = vmul.f32 %v2487, 0.2
      %v2552 = vmul.f32 %v2488, 0.2
      %v2553 = vmul.f32 %v2489, 0.2
      %v2554 = vmul.f32 %v2490, 0.2
      %v2555 = vmul.f32 %v2491, 0.2
      %v2556 = vmul.f32 %v2492, 0.2
      %v2557 = vmul.f32 %v2493, 0.2
      %v2558 = vmul.f32 %v2494, 0.2
      %v2559 = vmul.f32 %v2495, 0.2
      %v2560 = vmul.f32 %v2496, 0.2
      %v2561 = vmul.f32 %v2497, 0.2
      %v2562 = vmul.f32 %v2498, 0.2
      %v2563 = vmul.f32 %v2499, 0.2
      %v2564 = vmul.f32 %v2500, 0.2
      %v2565 = vmul.f32 %v2501, 0.2
      %v2566 = vmul.f32 %v2502, 0.2
      %v2567 = vsel %vm2503, %v2471, %v2535
      %v2568 = vsel %vm2504, %v2472, %v2536
      %v2569 = vsel %vm2505, %v2473, %v2537
      %v2570 = vsel %vm2506, %v2474, %v2538
      %v2571 = vsel %vm2507, %v2475, %v2539
      %v2572 = vsel %vm2508, %v2476, %v2540
      %v2573 = vsel %vm2509, %v2477, %v2541
      %v2574 = vsel %vm2510, %v2478, %v2542
      %v2575 = vsel %vm2511, %v2479, %v2543
      %v2576 = vsel %vm2512, %v2480, %v2544
      %v2577 = vsel %vm2513, %v2481, %v2545
      %v2578 = vsel %vm2514, %v2482, %v2546
      %v2579 = vsel %vm2515, %v2483, %v2547
      %v2580 = vsel %vm2516, %v2484, %v2548
      %v2581 = vsel %vm2517, %v2485, %v2549
      %v2582 = vsel %vm2518, %v2486, %v2550
      %v2583 = vsel %vm2519, %v2487, %v2551
      %v2584 = vsel %vm2520, %v2488, %v2552
      %v2585 = vsel %vm2521, %v2489, %v2553
      %v2586 = vsel %vm2522, %v2490, %v2554
      %v2587 = vsel %vm2523, %v2491, %v2555
      %v2588 = vsel %vm2524, %v2492, %v2556
      %v2589 = vsel %vm2525, %v2493, %v2557
      %v2590 = vsel %vm2526, %v2494, %v2558
      %v2591 = vsel %vm2527, %v2495, %v2559
      %v2592 = vsel %vm2528, %v2496, %v2560
      %v2593 = vsel %vm2529, %v2497, %v2561
      %v2594 = vsel %vm2530, %v2498, %v2562
      %v2595 = vsel %vm2531, %v2499, %v2563
      %v2596 = vsel %vm2532, %v2500, %v2564
      %v2597 = vsel %vm2533, %v2501, %v2565
      %v2598 = vsel %vm2534, %v2502, %v2566
      %2599 = vst.msk [vmem:[%s391] sm:$0xff] %vm463, %v2567
      %2600 = vst.msk [vmem:[%s391 + $0x8] sm:$0xff] %vm463, %v2568
      %2601 = vst.msk [vmem:[%s391 + $0x10] sm:$0xff] %vm463, %v2569
      %2602 = vst.msk [vmem:[%s391 + $0x18] sm:$0xff] %vm463, %v2570
      %2603 = vst.msk [vmem:[%s391 + $0x20] sm:$0xff] %vm463, %v2571
      %2604 = vst.msk [vmem:[%s391 + $0x28] sm:$0xff] %vm463, %v2572
      %2605 = vst.msk [vmem:[%s391 + $0x30] sm:$0xff] %vm463, %v2573
      %2606 = vst.msk [vmem:[%s391 + $0x38] sm:$0xff] %vm463, %v2574
      %2607 = vst.msk [vmem:[%s391 + $0x40] sm:$0xff] %vm463, %v2575
      %2608 = vst.msk [vmem:[%s391 + $0x48] sm:$0xff] %vm463, %v2576
      %2609 = vst.msk [vmem:[%s391 + $0x50] sm:$0xff] %vm463, %v2577
      %2610 = vst.msk [vmem:[%s391 + $0x58] sm:$0xff] %vm463, %v2578
      %2611 = vst.msk [vmem:[%s391 + $0x60] sm:$0xff] %vm463, %v2579
      %2612 = vst.msk [vmem:[%s391 + $0x68] sm:$0xff] %vm463, %v2580
      %2613 = vst.msk [vmem:[%s391 + $0x70] sm:$0xff] %vm463, %v2581
      %2614 = vst.msk [vmem:[%s391 + $0x78] sm:$0xff] %vm463, %v2582
      %2615 = vst.msk [vmem:[%s391 + $0x80] sm:$0xff] %vm463, %v2583
      %2616 = vst.msk [vmem:[%s391 + $0x88] sm:$0xff] %vm463, %v2584
      %2617 = vst.msk [vmem:[%s391 + $0x90] sm:$0xff] %vm463, %v2585
      %2618 = vst.msk [vmem:[%s391 + $0x98] sm:$0xff] %vm463, %v2586
      %2619 = vst.msk [vmem:[%s391 + $0xa0] sm:$0xff] %vm463, %v2587
      %2620 = vst.msk [vmem:[%s391 + $0xa8] sm:$0xff] %vm463, %v2588
      %2621 = vst.msk [vmem:[%s391 + $0xb0] sm:$0xff] %vm463, %v2589
      %2622 = vst.msk [vmem:[%s391 + $0xb8] sm:$0xff] %vm463, %v2590
      %2623 = vst.msk [vmem:[%s391 + $0xc0] sm:$0xff] %vm463, %v2591
      %2624 = vst.msk [vmem:[%s391 + $0xc8] sm:$0xff] %vm463, %v2592
      %2625 = vst.msk [vmem:[%s391 + $0xd0] sm:$0xff] %vm463, %v2593
      %2626 = vst.msk [vmem:[%s391 + $0xd8] sm:$0xff] %vm463, %v2594
      %2627 = vst.msk [vmem:[%s391 + $0xe0] sm:$0xff] %vm463, %v2595
      %2628 = vst.msk [vmem:[%s391 + $0xe8] sm:$0xff] %vm463, %v2596
      %2629 = vst.msk [vmem:[%s391 + $0xf0] sm:$0xff] %vm463, %v2597
      %2630 = vst.msk [vmem:[%s391 + $0xf8] sm:$0xff] %vm463, %v2598
      %s2631 = smul.u32 16, %s21
      %p2632 = scmp.lt.s32.totalorder %s20, 1
      %s2633 = scalar_select %p2632, %s20, 1
      %p2634 = scmp.lt.s32.totalorder %s2631, 15
      %s2635 = scalar_select %p2634, %s2631, 15
      %s2636 = smul.addr %s2635, 2
      %s2637 = smul.addr %s2633, 32
      %s2638 = sadd.s32 %s2636, %s2637
      %s2639 = smul.addr %s2638, 8
      %s2640 = scalar_lea.vmem %s5, %s2639
      // Predicated region
      $region57: #{tpu_custom_call.1} parent=39 // pred_check
        %p2641 = pneg %p190
      $region58: #{tpu_custom_call.1} parent=39 // pred_check_branch
        %2643 = sbr.rel (%p2641) target = $region60
      $region59: #{tpu_custom_call.1} parent=39 // pred_region
        %s2644 = smul.u32 16, %s21
      $region60: #{tpu_custom_call.1} parent=39 // pred_fallthru
        _
    $region40: #{tpu_custom_call.1} parent=5 // pred_fallthru
      _
    %p2645 = scmp.le.s32.totalorder 2, %s11
    // Predicated region
    $region61: #{tpu_custom_call.1} parent=5 // pred_check
      %p2646 = pneg %p2645
    $region62: #{tpu_custom_call.1} parent=5 // pred_check_branch
      %2648 = sbr.rel (%p2646) target = $region64
    $region63: #{tpu_custom_call.1} parent=5 // pred_region
      %s2649 = ssub.s32 %s11, 2
      // Predicated region
      $region65: #{tpu_custom_call.1} parent=63 // pred_check
        %p2650 = pneg %p196
      $region66: #{tpu_custom_call.1} parent=63 // pred_check_branch
        %2652 = sbr.rel (%p2650) target = $region68
      $region67: #{tpu_custom_call.1} parent=63 // pred_region
        %s2653 = smul.u32 16, %s23
        %p2654 = scmp.lt.s32.totalorder %s22, 1
        %s2655 = scalar_select %p2654, %s22, 1
        %p2656 = scmp.lt.s32.totalorder %s2653, 15
        %s2657 = scalar_select %p2656, %s2653, 15
        %s2658 = smul.addr %s2657, 2
        %s2659 = smul.addr %s2655, 32
        %s2660 = sadd.s32 %s2658, %s2659
        %s2661 = smul.addr %s2660, 8
        %s2662 = scalar_lea.vmem %s5, %s2661
      $region68: #{tpu_custom_call.1} parent=63 // pred_fallthru
        _
    $region64: #{tpu_custom_call.1} parent=5 // pred_fallthru
      _
  $region6: #{tpu_custom_call.1} parent=0 // loop_footer
    %s15 = sadd.s32 1, %s11
  $region7: #{tpu_custom_call.1} parent=0 // loop_footer_branch
    %10 = sbr.rel target = $region3
  $region8: #{tpu_custom_call.1} parent=0 // loop_exit
    _

</llo_original>
